<compile_context>
chip_gen: v7x
topology: tpu7x:2x2x1
jax: 0.10.0
libtpu: 0.0.40
codegen_flags: <defaults>
</compile_context>

<pallas_src>
import math
import jax
import jax.numpy as jnp
from jax.experimental import pallas as pl
from jax.experimental.pallas import tpu as pltpu

# ----- small PhoBERT-like config (synthetic; real PhoBERT is 768/12/12/64001) -----
VOCAB   = 64
HIDDEN  = 32
N_HEADS = 2
HEAD_D  = HIDDEN // N_HEADS
FFN     = 64
LAYERS  = 2
MAX_POS = 32
LN_EPS  = 1e-5
PAD_IDX = 1


# --------------------------- in-kernel helpers -------------------------------

def _ln(x, g, b):
    """LayerNorm over the last axis, f32 statistics."""
    mu = jnp.mean(x, axis=-1, keepdims=True)
    var = jnp.mean(jnp.square(x - mu), axis=-1, keepdims=True)
    return (x - mu) * jax.lax.rsqrt(var + LN_EPS) * g + b


def _gelu(h):
    # tanh-approx GELU (exact-erf GELU of HF RoBERTa differs by <1e-3); f32 on EUP.
    c = math.sqrt(2.0 / math.pi)
    return 0.5 * h * (1.0 + jnp.tanh(c * (h + 0.044715 * h * h * h)))


# --------------------------- Pallas kernels ----------------------------------

def _ln_kernel(x_ref, g_ref, b_ref, o_ref):
    """Plain LayerNorm (embedding LN) — no residual input, no zeros array."""
    o_ref[0] = _ln(x_ref[0], g_ref[...], b_ref[...])


def _attn_block_kernel(x_ref, qkv_w_ref, qkv_b_ref, o_w_ref, o_b_ref,
                       g_ref, b_ref, bias_ref, o_ref):
    """Fused: QKV proj -> per-head attention -> out proj -> add -> LayerNorm."""
    x = x_ref[0]                                   # [S, H] f32
    x_bf = x.astype(jnp.bfloat16)
    qkv = (jnp.dot(x_bf, qkv_w_ref[...],           # bf16 x bf16 -> f32 acc
                   preferred_element_type=jnp.float32) + qkv_b_ref[...])   # [S, 3H]
    bias = bias_ref[0]                             # [1, S] additive key mask
    scale = 1.0 / math.sqrt(HEAD_D)

    ctx_heads = []
    for h in range(N_HEADS):                       # static unroll; heads live in VMEM
        q = qkv[:, h * HEAD_D:(h + 1) * HEAD_D]
        k = qkv[:, HIDDEN + h * HEAD_D:HIDDEN + (h + 1) * HEAD_D]
        v = qkv[:, 2 * HIDDEN + h * HEAD_D:2 * HIDDEN + (h + 1) * HEAD_D]
        s = (jnp.dot(q.astype(jnp.bfloat16), k.astype(jnp.bfloat16).T,
                     preferred_element_type=jnp.float32) * scale + bias)   # [S, S]
        m = jnp.max(s, axis=-1, keepdims=True)
        p = jnp.exp(s - m)
        inv = pl.reciprocal(jnp.sum(p, axis=-1, keepdims=True), approx=True)
        ctx_heads.append(jnp.dot((p * inv).astype(jnp.bfloat16),
                                 v.astype(jnp.bfloat16),
                                 preferred_element_type=jnp.float32))
    ctx = jnp.concatenate(ctx_heads, axis=-1)      # [S, H]  (merge heads in-VMEM)

    attn_out = (jnp.dot(ctx.astype(jnp.bfloat16), o_w_ref[...],
                        preferred_element_type=jnp.float32) + o_b_ref[...])
    o_ref[0] = _ln(attn_out + x, g_ref[...], b_ref[...])


def _ffn_block_kernel(x_ref, i_w_ref, i_b_ref, f_w_ref, f_b_ref,
                      g_ref, b_ref, o_ref):
    """Fused: up-proj + GELU -> down-proj -> residual add -> LayerNorm."""
    x = x_ref[0]                                   # [S, H] f32
    h = (jnp.dot(x.astype(jnp.bfloat16), i_w_ref[...],
                 preferred_element_type=jnp.float32) + i_b_ref[...])       # [S, F]
    h = _gelu(h)                                   # f32 epilogue (v5e-safe)
    y = (jnp.dot(h.astype(jnp.bfloat16), f_w_ref[...],
                 preferred_element_type=jnp.float32) + f_b_ref[...])       # [S, H]
    o_ref[0] = _ln(y + x, g_ref[...], b_ref[...])


def _cls_xent_kernel(x_ref, w_ref, b_ref, lab_ref,
                     logits_ref, loss_ref, cnt_ref):
    """Fused classifier dense + masked cross-entropy partials (per batch row)."""
    x = x_ref[0].astype(jnp.bfloat16)              # [S, H]
    logits = (jnp.dot(x, w_ref[...],
                      preferred_element_type=jnp.float32) + b_ref[...])    # [S, V]
    logits_ref[0] = logits

    labels = lab_ref[0]                            # [S, 1] int32, -100 = ignore
    m = jnp.max(logits, axis=-1, keepdims=True)
    lse = jnp.log(jnp.sum(jnp.exp(logits - m), axis=-1, keepdims=True)) + m
    col = jax.lax.broadcasted_iota(jnp.int32, logits.shape, 1)
    picked = jnp.sum(jnp.where(col == labels, logits, 0.0),
                     axis=-1, keepdims=True)       # gather via masked reduce
    valid = (labels != -100).astype(jnp.float32)
    nll = (lse - picked) * valid                   # [S, 1]
    loss_ref[0] = jnp.sum(nll, axis=0, keepdims=True)
    cnt_ref[0] = jnp.sum(valid, axis=0, keepdims=True)


# --------------------------- pallas_call wrappers -----------------------------

_PAR = pltpu.CompilerParams(dimension_semantics=("parallel",))


def embed_layernorm(x, g, b):
    B, S, H = x.shape
    return pl.pallas_call(
        _ln_kernel,
        out_shape=jax.ShapeDtypeStruct((B, S, H), jnp.float32),
        grid=(B,),
        in_specs=[pl.BlockSpec((1, S, H), lambda i: (i, 0, 0)),
                  pl.BlockSpec((1, H), lambda i: (0, 0)),
                  pl.BlockSpec((1, H), lambda i: (0, 0))],
        out_specs=pl.BlockSpec((1, S, H), lambda i: (i, 0, 0)),
        compiler_params=_PAR,
    )(x, g, b)


def attn_block(x, lp, bias3):
    B, S, H = x.shape
    return pl.pallas_call(
        _attn_block_kernel,
        out_shape=jax.ShapeDtypeStruct((B, S, H), jnp.float32),
        grid=(B,),
        in_specs=[pl.BlockSpec((1, S, H), lambda i: (i, 0, 0)),
                  pl.BlockSpec((H, 3 * H), lambda i: (0, 0)),
                  pl.BlockSpec((1, 3 * H), lambda i: (0, 0)),
                  pl.BlockSpec((H, H), lambda i: (0, 0)),
                  pl.BlockSpec((1, H), lambda i: (0, 0)),
                  pl.BlockSpec((1, H), lambda i: (0, 0)),
                  pl.BlockSpec((1, H), lambda i: (0, 0)),
                  pl.BlockSpec((1, 1, S), lambda i: (i, 0, 0))],
        out_specs=pl.BlockSpec((1, S, H), lambda i: (i, 0, 0)),
        compiler_params=_PAR,
    )(x, lp["qkv_w"], lp["qkv_b"], lp["o_w"], lp["o_b"],
      lp["ln1_g"], lp["ln1_b"], bias3)


def ffn_block(x, lp):
    B, S, H = x.shape
    F = lp["i_w"].shape[1]
    return pl.pallas_call(
        _ffn_block_kernel,
        out_shape=jax.ShapeDtypeStruct((B, S, H), jnp.float32),
        grid=(B,),
        in_specs=[pl.BlockSpec((1, S, H), lambda i: (i, 0, 0)),
                  pl.BlockSpec((H, F), lambda i: (0, 0)),
                  pl.BlockSpec((1, F), lambda i: (0, 0)),
                  pl.BlockSpec((F, H), lambda i: (0, 0)),
                  pl.BlockSpec((1, H), lambda i: (0, 0)),
                  pl.BlockSpec((1, H), lambda i: (0, 0)),
                  pl.BlockSpec((1, H), lambda i: (0, 0))],
        out_specs=pl.BlockSpec((1, S, H), lambda i: (i, 0, 0)),
        compiler_params=_PAR,
    )(x, lp["i_w"], lp["i_b"], lp["f_w"], lp["f_b"], lp["ln2_g"], lp["ln2_b"])


def classifier_and_loss(x, w, b, labels3):
    B, S, H = x.shape
    V = w.shape[1]
    return pl.pallas_call(
        _cls_xent_kernel,
        out_shape=(jax.ShapeDtypeStruct((B, S, V), jnp.float32),
                   jax.ShapeDtypeStruct((B, 1, 1), jnp.float32),
                   jax.ShapeDtypeStruct((B, 1, 1), jnp.float32)),
        grid=(B,),
        in_specs=[pl.BlockSpec((1, S, H), lambda i: (i, 0, 0)),
                  pl.BlockSpec((H, V), lambda i: (0, 0)),
                  pl.BlockSpec((1, V), lambda i: (0, 0)),
                  pl.BlockSpec((1, S, 1), lambda i: (i, 0, 0))],
        out_specs=(pl.BlockSpec((1, S, V), lambda i: (i, 0, 0)),
                   pl.BlockSpec((1, 1, 1), lambda i: (i, 0, 0)),
                   pl.BlockSpec((1, 1, 1), lambda i: (i, 0, 0))),
        compiler_params=_PAR,
    )(x, w, b, labels3)


# --------------------------- model glue (plain JAX) ---------------------------

def init_params(key):
    ks = iter(jax.random.split(key, 64))
    W = jnp.bfloat16        # matmul weights stored bf16 (halves HBM traffic)

    def nrm(shape, dtype=jnp.float32):
        return (0.02 * jax.random.normal(next(ks), shape, jnp.float32)).astype(dtype)

    params = {
        "word_emb": nrm((VOCAB, HIDDEN)),
        "pos_emb": nrm((MAX_POS, HIDDEN)),
        "type_emb": nrm((1, HIDDEN)),
        "emb_ln_g": jnp.ones((1, HIDDEN), jnp.float32),
        "emb_ln_b": jnp.zeros((1, HIDDEN), jnp.float32),
        "cls_w": nrm((HIDDEN, VOCAB), W),
        "cls_b": jnp.zeros((1, VOCAB), jnp.float32),
        "layers": [],
    }
    for _ in range(LAYERS):
        params["layers"].append({
            # Q/K/V fused into one [H, 3H] weight (feedback item 1)
            "qkv_w": nrm((HIDDEN, 3 * HIDDEN), W),
            "qkv_b": jnp.zeros((1, 3 * HIDDEN), jnp.float32),
            "o_w": nrm((HIDDEN, HIDDEN), W), "o_b": jnp.zeros((1, HIDDEN), jnp.float32),
            "ln1_g": jnp.ones((1, HIDDEN), jnp.float32),
            "ln1_b": jnp.zeros((1, HIDDEN), jnp.float32),
            "i_w": nrm((HIDDEN, FFN), W), "i_b": jnp.zeros((1, FFN), jnp.float32),
            "f_w": nrm((FFN, HIDDEN), W), "f_b": jnp.zeros((1, HIDDEN), jnp.float32),
            "ln2_g": jnp.ones((1, HIDDEN), jnp.float32),
            "ln2_b": jnp.zeros((1, HIDDEN), jnp.float32),
        })
    return params


def medical_phobert_forward(params, input_ids, attention_mask, labels=None):
    B, S = input_ids.shape
    mask_f = attention_mask.astype(jnp.float32)

    # RoBERTa-style position ids (pad_idx offset), clipped to the table size.
    position_ids = jnp.minimum(
        jnp.cumsum(attention_mask, axis=1) * attention_mask + PAD_IDX,
        MAX_POS - 1).astype(jnp.int32)
    emb = (jnp.take(params["word_emb"], input_ids, axis=0)
           + jnp.take(params["pos_emb"], position_ids, axis=0)
           + params["type_emb"][0])                              # [B, S, H]
    x = embed_layernorm(emb, params["emb_ln_g"], params["emb_ln_b"])
    # nn.Dropout(0.1) is the identity at inference time.
    # TODO(synk): training-mode dropout (pltpu.prng_*) not implemented.

    bias3 = ((1.0 - mask_f) * -1e9).reshape(B, 1, S)             # additive key mask

    for lp in params["layers"]:
        x = attn_block(x, lp, bias3)
        x = ffn_block(x, lp)

    # sequence_output -> dropout (identity) -> classifier (+ fused masked CE)
    if labels is None:
        labels3 = jnp.full((B, S, 1), -100, jnp.int32)
    else:
        labels3 = labels.reshape(B, S, 1).astype(jnp.int32)

    logits, loss_p, cnt_p = classifier_and_loss(
        x, params["cls_w"], params["cls_b"], labels3)

    outputs = {"logits": logits}                                 # [B, S, V]
    if labels is not None:
        outputs["loss"] = jnp.sum(loss_p) / jnp.maximum(jnp.sum(cnt_p), 1.0)
    return outputs


# --------------------------------- main ---------------------------------------

if __name__ == "__main__":
    B, S = 2, 8
    key = jax.random.PRNGKey(0)
    kp, ki, kl = jax.random.split(key, 3)

    params = init_params(kp)
    input_ids = jax.random.randint(ki, (B, S), 0, VOCAB, dtype=jnp.int32)
    attention_mask = jnp.array([[1] * S,
                                [1] * (S - 2) + [0] * 2], dtype=jnp.int32)
    labels = jax.random.randint(kl, (B, S), 0, VOCAB, dtype=jnp.int32)
    labels = jnp.where(attention_mask == 1, labels, -100)

    fwd = jax.jit(medical_phobert_forward)
    out = fwd(params, input_ids, attention_mask, labels)
    jax.block_until_ready(out["logits"])
    jax.block_until_ready(out["loss"])

    assert out["logits"].shape == (B, S, VOCAB)
    assert bool(jnp.isfinite(out["loss"]))
    print("KERNEL_OK")
</pallas_src>

<mosaic_0001>
module attributes {stable_mosaic.version = 11 : i64} {
  func.func @_ln_kernel(%arg0: i32, %arg1: memref<1x8x32xf32, #tpu.memory_space<vmem>>, %arg2: memref<1x32xf32, #tpu.memory_space<vmem>>, %arg3: memref<1x32xf32, #tpu.memory_space<vmem>>, %arg4: memref<1x8x32xf32, #tpu.memory_space<vmem>>) attributes {dimension_semantics = [#tpu.dimension_semantics<parallel>], iteration_bounds = array<i64: 2>, scalar_prefetch = 0 : i64, scratch_operands = 0 : i64, tpu.core_type = #tpu.core_type<tc>, window_params = [{transform_indices = @transform_0, window_bounds = array<i64: 1, 8, 32>}, {pipeline_mode = #tpu.pipeline_mode<synchronous>, transform_indices = @transform_1, window_bounds = array<i64: 1, 32>}, {pipeline_mode = #tpu.pipeline_mode<synchronous>, transform_indices = @transform_2, window_bounds = array<i64: 1, 32>}, {transform_indices = @transform_3, window_bounds = array<i64: 1, 8, 32>}]} {
    %c0 = arith.constant 0 : index
    %c0_0 = arith.constant 0 : index
    %c0_1 = arith.constant 0 : index
    %0 = vector.load %arg1[%c0, %c0_0, %c0_1] : memref<1x8x32xf32, #tpu.memory_space<vmem>>, vector<1x8x32xf32>
    %1 = vector.shape_cast %0 : vector<1x8x32xf32> to vector<8x32xf32>
    %c0_2 = arith.constant 0 : index
    %c0_3 = arith.constant 0 : index
    %2 = vector.load %arg2[%c0_2, %c0_3] : memref<1x32xf32, #tpu.memory_space<vmem>>, vector<1x32xf32>
    %c0_4 = arith.constant 0 : index
    %c0_5 = arith.constant 0 : index
    %3 = vector.load %arg3[%c0_4, %c0_5] : memref<1x32xf32, #tpu.memory_space<vmem>>, vector<1x32xf32>
    %cst = arith.constant dense<0.000000e+00> : vector<8xf32>
    %4 = vector.multi_reduction <add>, %1, %cst [1] : vector<8x32xf32> to vector<8xf32>
    %5 = vector.shape_cast %4 : vector<8xf32> to vector<8x1xf32>
    %cst_6 = arith.constant 3.200000e+01 : f32
    %6 = vector.broadcast %cst_6 : f32 to vector<8x1xf32>
    %7 = arith.divf %5, %6 : vector<8x1xf32>
    %8 = vector.broadcast %7 : vector<8x1xf32> to vector<8x32xf32>
    %9 = arith.subf %1, %8 : vector<8x32xf32>
    %10 = arith.mulf %9, %9 : vector<8x32xf32>
    %cst_7 = arith.constant dense<0.000000e+00> : vector<8xf32>
    %11 = vector.multi_reduction <add>, %10, %cst_7 [1] : vector<8x32xf32> to vector<8xf32>
    %12 = vector.shape_cast %11 : vector<8xf32> to vector<8x1xf32>
    %cst_8 = arith.constant 3.200000e+01 : f32
    %13 = vector.broadcast %cst_8 : f32 to vector<8x1xf32>
    %14 = arith.divf %12, %13 : vector<8x1xf32>
    %15 = vector.broadcast %7 : vector<8x1xf32> to vector<8x32xf32>
    %16 = arith.subf %1, %15 : vector<8x32xf32>
    %cst_9 = arith.constant 9.99999974E-6 : f32
    %17 = vector.broadcast %cst_9 : f32 to vector<8x1xf32>
    %18 = arith.addf %14, %17 : vector<8x1xf32>
    %19 = math.rsqrt %18 : vector<8x1xf32>
    %20 = vector.broadcast %19 : vector<8x1xf32> to vector<8x32xf32>
    %21 = arith.mulf %16, %20 : vector<8x32xf32>
    %22 = vector.broadcast %2 : vector<1x32xf32> to vector<8x32xf32>
    %23 = arith.mulf %21, %22 : vector<8x32xf32>
    %24 = vector.broadcast %3 : vector<1x32xf32> to vector<8x32xf32>
    %25 = arith.addf %23, %24 : vector<8x32xf32>
    %c0_10 = arith.constant 0 : index
    %c0_11 = arith.constant 0 : index
    %c0_12 = arith.constant 0 : index
    %26 = vector.load %arg4[%c0_10, %c0_11, %c0_12] : memref<1x8x32xf32, #tpu.memory_space<vmem>>, vector<1x8x32xf32>
    %27 = vector.shape_cast %26 : vector<1x8x32xf32> to vector<8x32xf32>
    %28 = vector.shape_cast %25 : vector<8x32xf32> to vector<1x8x32xf32>
    tpu.vector_store %arg4[%c0_10, %c0_11, %c0_12], %28 {strides = array<i32>} : memref<1x8x32xf32, #tpu.memory_space<vmem>>, vector<1x8x32xf32>,
    return
  }
  func.func @transform_0(%arg0: i32) -> (i32, i32, i32) {
    %c0_i32 = arith.constant 0 : i32
    %c0_i32_0 = arith.constant 0 : i32
    %c0_i32_1 = arith.constant 0 : i32
    return %arg0, %c0_i32, %c0_i32_0 : i32, i32, i32
  }
  func.func @transform_1(%arg0: i32) -> (i32, i32) {
    %c0_i32 = arith.constant 0 : i32
    %c0_i32_0 = arith.constant 0 : i32
    %c0_i32_1 = arith.constant 0 : i32
    return %c0_i32, %c0_i32_0 : i32, i32
  }
  func.func @transform_2(%arg0: i32) -> (i32, i32) {
    %c0_i32 = arith.constant 0 : i32
    %c0_i32_0 = arith.constant 0 : i32
    %c0_i32_1 = arith.constant 0 : i32
    return %c0_i32, %c0_i32_0 : i32, i32
  }
  func.func @transform_3(%arg0: i32) -> (i32, i32, i32) {
    %c0_i32 = arith.constant 0 : i32
    %c0_i32_0 = arith.constant 0 : i32
    %c0_i32_1 = arith.constant 0 : i32
    return %arg0, %c0_i32, %c0_i32_0 : i32, i32, i32
  }
}

module attributes {stable_mosaic.version = 11 : i64} {
  func.func @_ffn_block_kernel(%arg0: i32, %arg1: memref<1x8x32xf32, #tpu.memory_space<vmem>>, %arg2: memref<32x64xbf16, #tpu.memory_space<vmem>>, %arg3: memref<1x64xf32, #tpu.memory_space<vmem>>, %arg4: memref<64x32xbf16, #tpu.memory_space<vmem>>, %arg5: memref<1x32xf32, #tpu.memory_space<vmem>>, %arg6: memref<1x32xf32, #tpu.memory_space<vmem>>, %arg7: memref<1x32xf32, #tpu.memory_space<vmem>>, %arg8: memref<1x8x32xf32, #tpu.memory_space<vmem>>) attributes {dimension_semantics = [#tpu.dimension_semantics<parallel>], iteration_bounds = array<i64: 2>, scalar_prefetch = 0 : i64, scratch_operands = 0 : i64, tpu.core_type = #tpu.core_type<tc>, window_params = [{transform_indices = @transform_0, window_bounds = array<i64: 1, 8, 32>}, {pipeline_mode = #tpu.pipeline_mode<synchronous>, transform_indices = @transform_1, window_bounds = array<i64: 32, 64>}, {pipeline_mode = #tpu.pipeline_mode<synchronous>, transform_indices = @transform_2, window_bounds = array<i64: 1, 64>}, {pipeline_mode = #tpu.pipeline_mode<synchronous>, transform_indices = @transform_3, window_bounds = array<i64: 64, 32>}, {pipeline_mode = #tpu.pipeline_mode<synchronous>, transform_indices = @transform_4, window_bounds = array<i64: 1, 32>}, {pipeline_mode = #tpu.pipeline_mode<synchronous>, transform_indices = @transform_5, window_bounds = array<i64: 1, 32>}, {pipeline_mode = #tpu.pipeline_mode<synchronous>, transform_indices = @transform_6, window_bounds = array<i64: 1, 32>}, {transform_indices = @transform_7, window_bounds = array<i64: 1, 8, 32>}]} {
    %c0 = arith.constant 0 : index
    %c0_0 = arith.constant 0 : index
    %c0_1 = arith.constant 0 : index
    %0 = vector.load %arg1[%c0, %c0_0, %c0_1] : memref<1x8x32xf32, #tpu.memory_space<vmem>>, vector<1x8x32xf32>
    %1 = vector.shape_cast %0 : vector<1x8x32xf32> to vector<8x32xf32>
    %2 = arith.truncf %1 : vector<8x32xf32> to vector<8x32xbf16>
    %c0_2 = arith.constant 0 : index
    %c0_3 = arith.constant 0 : index
    %3 = vector.load %arg2[%c0_2, %c0_3] : memref<32x64xbf16, #tpu.memory_space<vmem>>, vector<32x64xbf16>
    %cst = arith.constant dense<0.000000e+00> : vector<8x64xf32>
    %4 = tpu.matmul %2, %3, %cst {dimension_numbers = #tpu.dot_dimension_numbers<[1], [0], [0], [1], [0, 0, 1, 1], [], []>} : vector<8x32xbf16>, vector<32x64xbf16>, vector<8x64xf32> -> vector<8x64xf32>
    %c0_4 = arith.constant 0 : index
    %c0_5 = arith.constant 0 : index
    %5 = vector.load %arg3[%c0_4, %c0_5] : memref<1x64xf32, #tpu.memory_space<vmem>>, vector<1x64xf32>
    %6 = vector.broadcast %5 : vector<1x64xf32> to vector<8x64xf32>
    %7 = arith.addf %4, %6 : vector<8x64xf32>
    %cst_6 = arith.constant 5.000000e-01 : f32
    %8 = vector.broadcast %cst_6 : f32 to vector<8x64xf32>
    %9 = arith.mulf %8, %7 : vector<8x64xf32>
    %cst_7 = arith.constant 4.471500e-02 : f32
    %10 = vector.broadcast %cst_7 : f32 to vector<8x64xf32>
    %11 = arith.mulf %10, %7 : vector<8x64xf32>
    %12 = arith.mulf %11, %7 : vector<8x64xf32>
    %13 = arith.mulf %12, %7 : vector<8x64xf32>
    %14 = arith.addf %7, %13 : vector<8x64xf32>
    %cst_8 = arith.constant 0.797884583 : f32
    %15 = vector.broadcast %cst_8 : f32 to vector<8x64xf32>
    %16 = arith.mulf %15, %14 : vector<8x64xf32>
    %17 = math.tanh %16 : vector<8x64xf32>
    %cst_9 = arith.constant 1.000000e+00 : f32
    %18 = vector.broadcast %cst_9 : f32 to vector<8x64xf32>
    %19 = arith.addf %18, %17 : vector<8x64xf32>
    %20 = arith.mulf %9, %19 : vector<8x64xf32>
    %21 = arith.truncf %20 : vector<8x64xf32> to vector<8x64xbf16>
    %c0_10 = arith.constant 0 : index
    %c0_11 = arith.constant 0 : index
    %22 = vector.load %arg4[%c0_10, %c0_11] : memref<64x32xbf16, #tpu.memory_space<vmem>>, vector<64x32xbf16>
    %cst_12 = arith.constant dense<0.000000e+00> : vector<8x32xf32>
    %23 = tpu.matmul %21, %22, %cst_12 {dimension_numbers = #tpu.dot_dimension_numbers<[1], [0], [0], [1], [0, 0, 1, 1], [], []>} : vector<8x64xbf16>, vector<64x32xbf16>, vector<8x32xf32> -> vector<8x32xf32>
    %c0_13 = arith.constant 0 : index
    %c0_14 = arith.constant 0 : index
    %24 = vector.load %arg5[%c0_13, %c0_14] : memref<1x32xf32, #tpu.memory_space<vmem>>, vector<1x32xf32>
    %25 = vector.broadcast %24 : vector<1x32xf32> to vector<8x32xf32>
    %26 = arith.addf %23, %25 : vector<8x32xf32>
    %27 = arith.addf %26, %1 : vector<8x32xf32>
    %c0_15 = arith.constant 0 : index
    %c0_16 = arith.constant 0 : index
    %28 = vector.load %arg6[%c0_15, %c0_16] : memref<1x32xf32, #tpu.memory_space<vmem>>, vector<1x32xf32>
    %c0_17 = arith.constant 0 : index
    %c0_18 = arith.constant 0 : index
    %29 = vector.load %arg7[%c0_17, %c0_18] : memref<1x32xf32, #tpu.memory_space<vmem>>, vector<1x32xf32>
    %cst_19 = arith.constant dense<0.000000e+00> : vector<8xf32>
    %30 = vector.multi_reduction <add>, %27, %cst_19 [1] : vector<8x32xf32> to vector<8xf32>
    %31 = vector.shape_cast %30 : vector<8xf32> to vector<8x1xf32>
    %cst_20 = arith.constant 3.200000e+01 : f32
    %32 = vector.broadcast %cst_20 : f32 to vector<8x1xf32>
    %33 = arith.divf %31, %32 : vector<8x1xf32>
    %34 = vector.broadcast %33 : vector<8x1xf32> to vector<8x32xf32>
    %35 = arith.subf %27, %34 : vector<8x32xf32>
    %36 = arith.mulf %35, %35 : vector<8x32xf32>
    %cst_21 = arith.constant dense<0.000000e+00> : vector<8xf32>
    %37 = vector.multi_reduction <add>, %36, %cst_21 [1] : vector<8x32xf32> to vector<8xf32>
    %38 = vector.shape_cast %37 : vector<8xf32> to vector<8x1xf32>
    %cst_22 = arith.constant 3.200000e+01 : f32
    %39 = vector.broadcast %cst_22 : f32 to vector<8x1xf32>
    %40 = arith.divf %38, %39 : vector<8x1xf32>
    %41 = vector.broadcast %33 : vector<8x1xf32> to vector<8x32xf32>
    %42 = arith.subf %27, %41 : vector<8x32xf32>
    %cst_23 = arith.constant 9.99999974E-6 : f32
    %43 = vector.broadcast %cst_23 : f32 to vector<8x1xf32>
    %44 = arith.addf %40, %43 : vector<8x1xf32>
    %45 = math.rsqrt %44 : vector<8x1xf32>
    %46 = vector.broadcast %45 : vector<8x1xf32> to vector<8x32xf32>
    %47 = arith.mulf %42, %46 : vector<8x32xf32>
    %48 = vector.broadcast %28 : vector<1x32xf32> to vector<8x32xf32>
    %49 = arith.mulf %47, %48 : vector<8x32xf32>
    %50 = vector.broadcast %29 : vector<1x32xf32> to vector<8x32xf32>
    %51 = arith.addf %49, %50 : vector<8x32xf32>
    %c0_24 = arith.constant 0 : index
    %c0_25 = arith.constant 0 : index
    %c0_26 = arith.constant 0 : index
    %52 = vector.load %arg8[%c0_24, %c0_25, %c0_26] : memref<1x8x32xf32, #tpu.memory_space<vmem>>, vector<1x8x32xf32>
    %53 = vector.shape_cast %52 : vector<1x8x32xf32> to vector<8x32xf32>
    %54 = vector.shape_cast %51 : vector<8x32xf32> to vector<1x8x32xf32>
    tpu.vector_store %arg8[%c0_24, %c0_25, %c0_26], %54 {strides = array<i32>} : memref<1x8x32xf32, #tpu.memory_space<vmem>>, vector<1x8x32xf32>,
    return
  }
  func.func @transform_0(%arg0: i32) -> (i32, i32, i32) {
    %c0_i32 = arith.constant 0 : i32
    %c0_i32_0 = arith.constant 0 : i32
    %c0_i32_1 = arith.constant 0 : i32
    return %arg0, %c0_i32, %c0_i32_0 : i32, i32, i32
  }
  func.func @transform_1(%arg0: i32) -> (i32, i32) {
    %c0_i32 = arith.constant 0 : i32
    %c0_i32_0 = arith.constant 0 : i32
    %c0_i32_1 = arith.constant 0 : i32
    return %c0_i32, %c0_i32_0 : i32, i32
  }
  func.func @transform_2(%arg0: i32) -> (i32, i32) {
    %c0_i32 = arith.constant 0 : i32
    %c0_i32_0 = arith.constant 0 : i32
    %c0_i32_1 = arith.constant 0 : i32
    return %c0_i32, %c0_i32_0 : i32, i32
  }
  func.func @transform_3(%arg0: i32) -> (i32, i32) {
    %c0_i32 = arith.constant 0 : i32
    %c0_i32_0 = arith.constant 0 : i32
    %c0_i32_1 = arith.constant 0 : i32
    return %c0_i32, %c0_i32_0 : i32, i32
  }
  func.func @transform_4(%arg0: i32) -> (i32, i32) {
    %c0_i32 = arith.constant 0 : i32
    %c0_i32_0 = arith.constant 0 : i32
    %c0_i32_1 = arith.constant 0 : i32
    return %c0_i32, %c0_i32_0 : i32, i32
  }
  func.func @transform_5(%arg0: i32) -> (i32, i32) {
    %c0_i32 = arith.constant 0 : i32
    %c0_i32_0 = arith.constant 0 : i32
    %c0_i32_1 = arith.constant 0 : i32
    return %c0_i32, %c0_i32_0 : i32, i32
  }
  func.func @transform_6(%arg0: i32) -> (i32, i32) {
    %c0_i32 = arith.constant 0 : i32
    %c0_i32_0 = arith.constant 0 : i32
    %c0_i32_1 = arith.constant 0 : i32
    return %c0_i32, %c0_i32_0 : i32, i32
  }
  func.func @transform_7(%arg0: i32) -> (i32, i32, i32) {
    %c0_i32 = arith.constant 0 : i32
    %c0_i32_0 = arith.constant 0 : i32
    %c0_i32_1 = arith.constant 0 : i32
    return %arg0, %c0_i32, %c0_i32_0 : i32, i32, i32
  }
}

module attributes {stable_mosaic.version = 11 : i64} {
  func.func @_attn_block_kernel(%arg0: i32, %arg1: memref<1x8x32xf32, #tpu.memory_space<vmem>>, %arg2: memref<32x96xbf16, #tpu.memory_space<vmem>>, %arg3: memref<1x96xf32, #tpu.memory_space<vmem>>, %arg4: memref<32x32xbf16, #tpu.memory_space<vmem>>, %arg5: memref<1x32xf32, #tpu.memory_space<vmem>>, %arg6: memref<1x32xf32, #tpu.memory_space<vmem>>, %arg7: memref<1x32xf32, #tpu.memory_space<vmem>>, %arg8: memref<1x1x8xf32, #tpu.memory_space<vmem>>, %arg9: memref<1x8x32xf32, #tpu.memory_space<vmem>>) attributes {dimension_semantics = [#tpu.dimension_semantics<parallel>], iteration_bounds = array<i64: 2>, scalar_prefetch = 0 : i64, scratch_operands = 0 : i64, tpu.core_type = #tpu.core_type<tc>, window_params = [{transform_indices = @transform_0, window_bounds = array<i64: 1, 8, 32>}, {pipeline_mode = #tpu.pipeline_mode<synchronous>, transform_indices = @transform_1, window_bounds = array<i64: 32, 96>}, {pipeline_mode = #tpu.pipeline_mode<synchronous>, transform_indices = @transform_2, window_bounds = array<i64: 1, 96>}, {pipeline_mode = #tpu.pipeline_mode<synchronous>, transform_indices = @transform_3, window_bounds = array<i64: 32, 32>}, {pipeline_mode = #tpu.pipeline_mode<synchronous>, transform_indices = @transform_4, window_bounds = array<i64: 1, 32>}, {pipeline_mode = #tpu.pipeline_mode<synchronous>, transform_indices = @transform_5, window_bounds = array<i64: 1, 32>}, {pipeline_mode = #tpu.pipeline_mode<synchronous>, transform_indices = @transform_6, window_bounds = array<i64: 1, 32>}, {transform_indices = @transform_7, window_bounds = array<i64: 1, 1, 8>}, {transform_indices = @transform_8, window_bounds = array<i64: 1, 8, 32>}]} {
    %c0 = arith.constant 0 : index
    %c0_0 = arith.constant 0 : index
    %c0_1 = arith.constant 0 : index
    %0 = vector.load %arg1[%c0, %c0_0, %c0_1] : memref<1x8x32xf32, #tpu.memory_space<vmem>>, vector<1x8x32xf32>
    %1 = vector.shape_cast %0 : vector<1x8x32xf32> to vector<8x32xf32>
    %2 = arith.truncf %1 : vector<8x32xf32> to vector<8x32xbf16>
    %c0_2 = arith.constant 0 : index
    %c0_3 = arith.constant 0 : index
    %3 = vector.load %arg2[%c0_2, %c0_3] : memref<32x96xbf16, #tpu.memory_space<vmem>>, vector<32x96xbf16>
    %cst = arith.constant dense<0.000000e+00> : vector<8x96xf32>
    %4 = tpu.matmul %2, %3, %cst {dimension_numbers = #tpu.dot_dimension_numbers<[1], [0], [0], [1], [0, 0, 1, 1], [], []>} : vector<8x32xbf16>, vector<32x96xbf16>, vector<8x96xf32> -> vector<8x96xf32>
    %c0_4 = arith.constant 0 : index
    %c0_5 = arith.constant 0 : index
    %5 = vector.load %arg3[%c0_4, %c0_5] : memref<1x96xf32, #tpu.memory_space<vmem>>, vector<1x96xf32>
    %6 = vector.broadcast %5 : vector<1x96xf32> to vector<8x96xf32>
    %7 = arith.addf %4, %6 : vector<8x96xf32>
    %c0_6 = arith.constant 0 : index
    %c0_7 = arith.constant 0 : index
    %c0_8 = arith.constant 0 : index
    %8 = vector.load %arg8[%c0_6, %c0_7, %c0_8] : memref<1x1x8xf32, #tpu.memory_space<vmem>>, vector<1x1x8xf32>
    %9 = vector.shape_cast %8 : vector<1x1x8xf32> to vector<1x8xf32>
    %10 = vector.extract_strided_slice %7 {offsets = [0, 0], sizes = [8, 16], strides = [1, 1]} : vector<8x96xf32> to vector<8x16xf32>
    %11 = vector.extract_strided_slice %7 {offsets = [0, 32], sizes = [8, 16], strides = [1, 1]} : vector<8x96xf32> to vector<8x16xf32>
    %12 = vector.extract_strided_slice %7 {offsets = [0, 64], sizes = [8, 16], strides = [1, 1]} : vector<8x96xf32> to vector<8x16xf32>
    %13 = arith.truncf %10 : vector<8x16xf32> to vector<8x16xbf16>
    %14 = arith.truncf %11 : vector<8x16xf32> to vector<8x16xbf16>
    %15 = tpu.transpose %14, [1, 0] : vector<8x16xbf16> -> vector<16x8xbf16>
    %cst_9 = arith.constant dense<0.000000e+00> : vector<8x8xf32>
    %16 = tpu.matmul %13, %15, %cst_9 {dimension_numbers = #tpu.dot_dimension_numbers<[1], [0], [0], [1], [0, 0, 1, 1], [], []>} : vector<8x16xbf16>, vector<16x8xbf16>, vector<8x8xf32> -> vector<8x8xf32>
    %cst_10 = arith.constant 2.500000e-01 : f32
    %17 = vector.broadcast %cst_10 : f32 to vector<8x8xf32>
    %18 = arith.mulf %16, %17 : vector<8x8xf32>
    %19 = vector.broadcast %9 : vector<1x8xf32> to vector<8x8xf32>
    %20 = arith.addf %18, %19 : vector<8x8xf32>
    %cst_11 = arith.constant dense<0xFF800000> : vector<8xf32>
    %21 = vector.multi_reduction <maximumf>, %20, %cst_11 [1] : vector<8x8xf32> to vector<8xf32>
    %22 = vector.shape_cast %21 : vector<8xf32> to vector<8x1xf32>
    %23 = vector.broadcast %22 : vector<8x1xf32> to vector<8x8xf32>
    %24 = arith.subf %20, %23 : vector<8x8xf32>
    %25 = math.exp %24 : vector<8x8xf32>
    %cst_12 = arith.constant dense<0.000000e+00> : vector<8xf32>
    %26 = vector.multi_reduction <add>, %25, %cst_12 [1] : vector<8x8xf32> to vector<8xf32>
    %27 = vector.shape_cast %26 : vector<8xf32> to vector<8x1xf32>
    %28 = tpu.reciprocal %27 {approx = true} : vector<8x1xf32> -> vector<8x1xf32>
    %29 = vector.broadcast %28 : vector<8x1xf32> to vector<8x8xf32>
    %30 = arith.mulf %25, %29 : vector<8x8xf32>
    %31 = arith.truncf %30 : vector<8x8xf32> to vector<8x8xbf16>
    %32 = arith.truncf %12 : vector<8x16xf32> to vector<8x16xbf16>
    %cst_13 = arith.constant dense<0.000000e+00> : vector<8x16xf32>
    %33 = tpu.matmul %31, %32, %cst_13 {dimension_numbers = #tpu.dot_dimension_numbers<[1], [0], [0], [1], [0, 0, 1, 1], [], []>} : vector<8x8xbf16>, vector<8x16xbf16>, vector<8x16xf32> -> vector<8x16xf32>
    %34 = vector.extract_strided_slice %7 {offsets = [0, 16], sizes = [8, 16], strides = [1, 1]} : vector<8x96xf32> to vector<8x16xf32>
    %35 = vector.extract_strided_slice %7 {offsets = [0, 48], sizes = [8, 16], strides = [1, 1]} : vector<8x96xf32> to vector<8x16xf32>
    %36 = vector.extract_strided_slice %7 {offsets = [0, 80], sizes = [8, 16], strides = [1, 1]} : vector<8x96xf32> to vector<8x16xf32>
    %37 = arith.truncf %34 : vector<8x16xf32> to vector<8x16xbf16>
    %38 = arith.truncf %35 : vector<8x16xf32> to vector<8x16xbf16>
    %39 = tpu.transpose %38, [1, 0] : vector<8x16xbf16> -> vector<16x8xbf16>
    %cst_14 = arith.constant dense<0.000000e+00> : vector<8x8xf32>
    %40 = tpu.matmul %37, %39, %cst_14 {dimension_numbers = #tpu.dot_dimension_numbers<[1], [0], [0], [1], [0, 0, 1, 1], [], []>} : vector<8x16xbf16>, vector<16x8xbf16>, vector<8x8xf32> -> vector<8x8xf32>
    %cst_15 = arith.constant 2.500000e-01 : f32
    %41 = vector.broadcast %cst_15 : f32 to vector<8x8xf32>
    %42 = arith.mulf %40, %41 : vector<8x8xf32>
    %43 = vector.broadcast %9 : vector<1x8xf32> to vector<8x8xf32>
    %44 = arith.addf %42, %43 : vector<8x8xf32>
    %cst_16 = arith.constant dense<0xFF800000> : vector<8xf32>
    %45 = vector.multi_reduction <maximumf>, %44, %cst_16 [1] : vector<8x8xf32> to vector<8xf32>
    %46 = vector.shape_cast %45 : vector<8xf32> to vector<8x1xf32>
    %47 = vector.broadcast %46 : vector<8x1xf32> to vector<8x8xf32>
    %48 = arith.subf %44, %47 : vector<8x8xf32>
    %49 = math.exp %48 : vector<8x8xf32>
    %cst_17 = arith.constant dense<0.000000e+00> : vector<8xf32>
    %50 = vector.multi_reduction <add>, %49, %cst_17 [1] : vector<8x8xf32> to vector<8xf32>
    %51 = vector.shape_cast %50 : vector<8xf32> to vector<8x1xf32>
    %52 = tpu.reciprocal %51 {approx = true} : vector<8x1xf32> -> vector<8x1xf32>
    %53 = vector.broadcast %52 : vector<8x1xf32> to vector<8x8xf32>
    %54 = arith.mulf %49, %53 : vector<8x8xf32>
    %55 = arith.truncf %54 : vector<8x8xf32> to vector<8x8xbf16>
    %56 = arith.truncf %36 : vector<8x16xf32> to vector<8x16xbf16>
    %cst_18 = arith.constant dense<0.000000e+00> : vector<8x16xf32>
    %57 = tpu.matmul %55, %56, %cst_18 {dimension_numbers = #tpu.dot_dimension_numbers<[1], [0], [0], [1], [0, 0, 1, 1], [], []>} : vector<8x8xbf16>, vector<8x16xbf16>, vector<8x16xf32> -> vector<8x16xf32>
    %58 = tpu.concatenate %33, %57 in 1 : vector<8x16xf32>, vector<8x16xf32> -> vector<8x32xf32>
    %59 = arith.truncf %58 : vector<8x32xf32> to vector<8x32xbf16>
    %c0_19 = arith.constant 0 : index
    %c0_20 = arith.constant 0 : index
    %60 = vector.load %arg4[%c0_19, %c0_20] : memref<32x32xbf16, #tpu.memory_space<vmem>>, vector<32x32xbf16>
    %cst_21 = arith.constant dense<0.000000e+00> : vector<8x32xf32>
    %61 = tpu.matmul %59, %60, %cst_21 {dimension_numbers = #tpu.dot_dimension_numbers<[1], [0], [0], [1], [0, 0, 1, 1], [], []>} : vector<8x32xbf16>, vector<32x32xbf16>, vector<8x32xf32> -> vector<8x32xf32>
    %c0_22 = arith.constant 0 : index
    %c0_23 = arith.constant 0 : index
    %62 = vector.load %arg5[%c0_22, %c0_23] : memref<1x32xf32, #tpu.memory_space<vmem>>, vector<1x32xf32>
    %63 = vector.broadcast %62 : vector<1x32xf32> to vector<8x32xf32>
    %64 = arith.addf %61, %63 : vector<8x32xf32>
    %65 = arith.addf %64, %1 : vector<8x32xf32>
    %c0_24 = arith.constant 0 : index
    %c0_25 = arith.constant 0 : index
    %66 = vector.load %arg6[%c0_24, %c0_25] : memref<1x32xf32, #tpu.memory_space<vmem>>, vector<1x32xf32>
    %c0_26 = arith.constant 0 : index
    %c0_27 = arith.constant 0 : index
    %67 = vector.load %arg7[%c0_26, %c0_27] : memref<1x32xf32, #tpu.memory_space<vmem>>, vector<1x32xf32>
    %cst_28 = arith.constant dense<0.000000e+00> : vector<8xf32>
    %68 = vector.multi_reduction <add>, %65, %cst_28 [1] : vector<8x32xf32> to vector<8xf32>
    %69 = vector.shape_cast %68 : vector<8xf32> to vector<8x1xf32>
    %cst_29 = arith.constant 3.200000e+01 : f32
    %70 = vector.broadcast %cst_29 : f32 to vector<8x1xf32>
    %71 = arith.divf %69, %70 : vector<8x1xf32>
    %72 = vector.broadcast %71 : vector<8x1xf32> to vector<8x32xf32>
    %73 = arith.subf %65, %72 : vector<8x32xf32>
    %74 = arith.mulf %73, %73 : vector<8x32xf32>
    %cst_30 = arith.constant dense<0.000000e+00> : vector<8xf32>
    %75 = vector.multi_reduction <add>, %74, %cst_30 [1] : vector<8x32xf32> to vector<8xf32>
    %76 = vector.shape_cast %75 : vector<8xf32> to vector<8x1xf32>
    %cst_31 = arith.constant 3.200000e+01 : f32
    %77 = vector.broadcast %cst_31 : f32 to vector<8x1xf32>
    %78 = arith.divf %76, %77 : vector<8x1xf32>
    %79 = vector.broadcast %71 : vector<8x1xf32> to vector<8x32xf32>
    %80 = arith.subf %65, %79 : vector<8x32xf32>
    %cst_32 = arith.constant 9.99999974E-6 : f32
    %81 = vector.broadcast %cst_32 : f32 to vector<8x1xf32>
    %82 = arith.addf %78, %81 : vector<8x1xf32>
    %83 = math.rsqrt %82 : vector<8x1xf32>
    %84 = vector.broadcast %83 : vector<8x1xf32> to vector<8x32xf32>
    %85 = arith.mulf %80, %84 : vector<8x32xf32>
    %86 = vector.broadcast %66 : vector<1x32xf32> to vector<8x32xf32>
    %87 = arith.mulf %85, %86 : vector<8x32xf32>
    %88 = vector.broadcast %67 : vector<1x32xf32> to vector<8x32xf32>
    %89 = arith.addf %87, %88 : vector<8x32xf32>
    %c0_33 = arith.constant 0 : index
    %c0_34 = arith.constant 0 : index
    %c0_35 = arith.constant 0 : index
    %90 = vector.load %arg9[%c0_33, %c0_34, %c0_35] : memref<1x8x32xf32, #tpu.memory_space<vmem>>, vector<1x8x32xf32>
    %91 = vector.shape_cast %90 : vector<1x8x32xf32> to vector<8x32xf32>
    %92 = vector.shape_cast %89 : vector<8x32xf32> to vector<1x8x32xf32>
    tpu.vector_store %arg9[%c0_33, %c0_34, %c0_35], %92 {strides = array<i32>} : memref<1x8x32xf32, #tpu.memory_space<vmem>>, vector<1x8x32xf32>,
    return
  }
  func.func @transform_0(%arg0: i32) -> (i32, i32, i32) {
    %c0_i32 = arith.constant 0 : i32
    %c0_i32_0 = arith.constant 0 : i32
    %c0_i32_1 = arith.constant 0 : i32
    return %arg0, %c0_i32, %c0_i32_0 : i32, i32, i32
  }
  func.func @transform_1(%arg0: i32) -> (i32, i32) {
    %c0_i32 = arith.constant 0 : i32
    %c0_i32_0 = arith.constant 0 : i32
    %c0_i32_1 = arith.constant 0 : i32
    return %c0_i32, %c0_i32_0 : i32, i32
  }
  func.func @transform_2(%arg0: i32) -> (i32, i32) {
    %c0_i32 = arith.constant 0 : i32
    %c0_i32_0 = arith.constant 0 : i32
    %c0_i32_1 = arith.constant 0 : i32
    return %c0_i32, %c0_i32_0 : i32, i32
  }
  func.func @transform_3(%arg0: i32) -> (i32, i32) {
    %c0_i32 = arith.constant 0 : i32
    %c0_i32_0 = arith.constant 0 : i32
    %c0_i32_1 = arith.constant 0 : i32
    return %c0_i32, %c0_i32_0 : i32, i32
  }
  func.func @transform_4(%arg0: i32) -> (i32, i32) {
    %c0_i32 = arith.constant 0 : i32
    %c0_i32_0 = arith.constant 0 : i32
    %c0_i32_1 = arith.constant 0 : i32
    return %c0_i32, %c0_i32_0 : i32, i32
  }
  func.func @transform_5(%arg0: i32) -> (i32, i32) {
    %c0_i32 = arith.constant 0 : i32
    %c0_i32_0 = arith.constant 0 : i32
    %c0_i32_1 = arith.constant 0 : i32
    return %c0_i32, %c0_i32_0 : i32, i32
  }
  func.func @transform_6(%arg0: i32) -> (i32, i32) {
    %c0_i32 = arith.constant 0 : i32
    %c0_i32_0 = arith.constant 0 : i32
    %c0_i32_1 = arith.constant 0 : i32
    return %c0_i32, %c0_i32_0 : i32, i32
  }
  func.func @transform_7(%arg0: i32) -> (i32, i32, i32) {
    %c0_i32 = arith.constant 0 : i32
    %c0_i32_0 = arith.constant 0 : i32
    %c0_i32_1 = arith.constant 0 : i32
    return %arg0, %c0_i32, %c0_i32_0 : i32, i32, i32
  }
  func.func @transform_8(%arg0: i32) -> (i32, i32, i32) {
    %c0_i32 = arith.constant 0 : i32
    %c0_i32_0 = arith.constant 0 : i32
    %c0_i32_1 = arith.constant 0 : i32
    return %arg0, %c0_i32, %c0_i32_0 : i32, i32, i32
  }
}

module attributes {stable_mosaic.version = 11 : i64} {
  func.func @_cls_xent_kernel(%arg0: i32, %arg1: memref<1x8x32xf32, #tpu.memory_space<vmem>>, %arg2: memref<32x64xbf16, #tpu.memory_space<vmem>>, %arg3: memref<1x64xf32, #tpu.memory_space<vmem>>, %arg4: memref<1x8x1xi32, #tpu.memory_space<vmem>>, %arg5: memref<1x8x64xf32, #tpu.memory_space<vmem>>, %arg6: memref<1x1x1xf32, #tpu.memory_space<vmem>>, %arg7: memref<1x1x1xf32, #tpu.memory_space<vmem>>) attributes {dimension_semantics = [#tpu.dimension_semantics<parallel>], iteration_bounds = array<i64: 2>, scalar_prefetch = 0 : i64, scratch_operands = 0 : i64, tpu.core_type = #tpu.core_type<tc>, window_params = [{transform_indices = @transform_0, window_bounds = array<i64: 1, 8, 32>}, {pipeline_mode = #tpu.pipeline_mode<synchronous>, transform_indices = @transform_1, window_bounds = array<i64: 32, 64>}, {pipeline_mode = #tpu.pipeline_mode<synchronous>, transform_indices = @transform_2, window_bounds = array<i64: 1, 64>}, {transform_indices = @transform_3, window_bounds = array<i64: 1, 8, 1>}, {transform_indices = @transform_4, window_bounds = array<i64: 1, 8, 64>}, {transform_indices = @transform_5, window_bounds = array<i64: 1, 1, 1>}, {transform_indices = @transform_6, window_bounds = array<i64: 1, 1, 1>}]} {
    %c0 = arith.constant 0 : index
    %c0_0 = arith.constant 0 : index
    %c0_1 = arith.constant 0 : index
    %0 = vector.load %arg1[%c0, %c0_0, %c0_1] : memref<1x8x32xf32, #tpu.memory_space<vmem>>, vector<1x8x32xf32>
    %1 = vector.shape_cast %0 : vector<1x8x32xf32> to vector<8x32xf32>
    %2 = arith.truncf %1 : vector<8x32xf32> to vector<8x32xbf16>
    %c0_2 = arith.constant 0 : index
    %c0_3 = arith.constant 0 : index
    %3 = vector.load %arg2[%c0_2, %c0_3] : memref<32x64xbf16, #tpu.memory_space<vmem>>, vector<32x64xbf16>
    %cst = arith.constant dense<0.000000e+00> : vector<8x64xf32>
    %4 = tpu.matmul %2, %3, %cst {dimension_numbers = #tpu.dot_dimension_numbers<[1], [0], [0], [1], [0, 0, 1, 1], [], []>} : vector<8x32xbf16>, vector<32x64xbf16>, vector<8x64xf32> -> vector<8x64xf32>
    %c0_4 = arith.constant 0 : index
    %c0_5 = arith.constant 0 : index
    %5 = vector.load %arg3[%c0_4, %c0_5] : memref<1x64xf32, #tpu.memory_space<vmem>>, vector<1x64xf32>
    %6 = vector.broadcast %5 : vector<1x64xf32> to vector<8x64xf32>
    %7 = arith.addf %4, %6 : vector<8x64xf32>
    %c0_6 = arith.constant 0 : index
    %c0_7 = arith.constant 0 : index
    %c0_8 = arith.constant 0 : index
    %8 = vector.load %arg5[%c0_6, %c0_7, %c0_8] : memref<1x8x64xf32, #tpu.memory_space<vmem>>, vector<1x8x64xf32>
    %9 = vector.shape_cast %8 : vector<1x8x64xf32> to vector<8x64xf32>
    %10 = vector.shape_cast %7 : vector<8x64xf32> to vector<1x8x64xf32>
    tpu.vector_store %arg5[%c0_6, %c0_7, %c0_8], %10 {strides = array<i32>} : memref<1x8x64xf32, #tpu.memory_space<vmem>>, vector<1x8x64xf32>,
    %c0_9 = arith.constant 0 : index
    %c0_10 = arith.constant 0 : index
    %c0_11 = arith.constant 0 : index
    %11 = vector.load %arg4[%c0_9, %c0_10, %c0_11] : memref<1x8x1xi32, #tpu.memory_space<vmem>>, vector<1x8x1xi32>
    %12 = vector.shape_cast %11 : vector<1x8x1xi32> to vector<8x1xi32>
    %cst_12 = arith.constant dense<0xFF800000> : vector<8xf32>
    %13 = vector.multi_reduction <maximumf>, %7, %cst_12 [1] : vector<8x64xf32> to vector<8xf32>
    %14 = vector.shape_cast %13 : vector<8xf32> to vector<8x1xf32>
    %15 = vector.broadcast %14 : vector<8x1xf32> to vector<8x64xf32>
    %16 = arith.subf %7, %15 : vector<8x64xf32>
    %17 = math.exp %16 : vector<8x64xf32>
    %cst_13 = arith.constant dense<0.000000e+00> : vector<8xf32>
    %18 = vector.multi_reduction <add>, %17, %cst_13 [1] : vector<8x64xf32> to vector<8xf32>
    %19 = vector.shape_cast %18 : vector<8xf32> to vector<8x1xf32>
    %20 = math.log %19 : vector<8x1xf32>
    %21 = arith.addf %20, %14 : vector<8x1xf32>
    %22 = tpu.iota {dimensions = array<i32: 1>} : vector<8x64xi32>
    %23 = vector.broadcast %12 : vector<8x1xi32> to vector<8x64xi32>
    %24 = arith.cmpi eq, %22, %23 : vector<8x64xi32>
    %cst_14 = arith.constant 0.000000e+00 : f32
    %25 = vector.broadcast %cst_14 : f32 to vector<8x64xf32>
    %26 = arith.select %24, %7, %25 : vector<8x64xi1>, vector<8x64xf32>
    %cst_15 = arith.constant dense<0.000000e+00> : vector<8xf32>
    %27 = vector.multi_reduction <add>, %26, %cst_15 [1] : vector<8x64xf32> to vector<8xf32>
    %28 = vector.shape_cast %27 : vector<8xf32> to vector<8x1xf32>
    %c-100_i32 = arith.constant -100 : i32
    %29 = vector.broadcast %c-100_i32 : i32 to vector<8x1xi32>
    %30 = arith.cmpi ne, %12, %29 : vector<8x1xi32>
    %31 = arith.extui %30 : vector<8x1xi1> to vector<8x1xi32>
    %32 = arith.sitofp %31 : vector<8x1xi32> to vector<8x1xf32>
    %33 = arith.subf %21, %28 : vector<8x1xf32>
    %34 = arith.mulf %33, %32 : vector<8x1xf32>
    %cst_16 = arith.constant dense<0.000000e+00> : vector<1xf32>
    %35 = vector.multi_reduction <add>, %34, %cst_16 [0] : vector<8x1xf32> to vector<1xf32>
    %36 = vector.shape_cast %35 : vector<1xf32> to vector<1x1xf32>
    %c0_17 = arith.constant 0 : index
    %c0_18 = arith.constant 0 : index
    %c0_19 = arith.constant 0 : index
    %37 = vector.load %arg6[%c0_17, %c0_18, %c0_19] : memref<1x1x1xf32, #tpu.memory_space<vmem>>, vector<1x1x1xf32>
    %38 = vector.shape_cast %37 : vector<1x1x1xf32> to vector<1x1xf32>
    %39 = vector.shape_cast %36 : vector<1x1xf32> to vector<1x1x1xf32>
    tpu.vector_store %arg6[%c0_17, %c0_18, %c0_19], %39 {strides = array<i32>} : memref<1x1x1xf32, #tpu.memory_space<vmem>>, vector<1x1x1xf32>,
    %cst_20 = arith.constant dense<0.000000e+00> : vector<1xf32>
    %40 = vector.multi_reduction <add>, %32, %cst_20 [0] : vector<8x1xf32> to vector<1xf32>
    %41 = vector.shape_cast %40 : vector<1xf32> to vector<1x1xf32>
    %c0_21 = arith.constant 0 : index
    %c0_22 = arith.constant 0 : index
    %c0_23 = arith.constant 0 : index
    %42 = vector.load %arg7[%c0_21, %c0_22, %c0_23] : memref<1x1x1xf32, #tpu.memory_space<vmem>>, vector<1x1x1xf32>
    %43 = vector.shape_cast %42 : vector<1x1x1xf32> to vector<1x1xf32>
    %44 = vector.shape_cast %41 : vector<1x1xf32> to vector<1x1x1xf32>
    tpu.vector_store %arg7[%c0_21, %c0_22, %c0_23], %44 {strides = array<i32>} : memref<1x1x1xf32, #tpu.memory_space<vmem>>, vector<1x1x1xf32>,
    return
  }
  func.func @transform_0(%arg0: i32) -> (i32, i32, i32) {
    %c0_i32 = arith.constant 0 : i32
    %c0_i32_0 = arith.constant 0 : i32
    %c0_i32_1 = arith.constant 0 : i32
    return %arg0, %c0_i32, %c0_i32_0 : i32, i32, i32
  }
  func.func @transform_1(%arg0: i32) -> (i32, i32) {
    %c0_i32 = arith.constant 0 : i32
    %c0_i32_0 = arith.constant 0 : i32
    %c0_i32_1 = arith.constant 0 : i32
    return %c0_i32, %c0_i32_0 : i32, i32
  }
  func.func @transform_2(%arg0: i32) -> (i32, i32) {
    %c0_i32 = arith.constant 0 : i32
    %c0_i32_0 = arith.constant 0 : i32
    %c0_i32_1 = arith.constant 0 : i32
    return %c0_i32, %c0_i32_0 : i32, i32
  }
  func.func @transform_3(%arg0: i32) -> (i32, i32, i32) {
    %c0_i32 = arith.constant 0 : i32
    %c0_i32_0 = arith.constant 0 : i32
    %c0_i32_1 = arith.constant 0 : i32
    return %arg0, %c0_i32, %c0_i32_0 : i32, i32, i32
  }
  func.func @transform_4(%arg0: i32) -> (i32, i32, i32) {
    %c0_i32 = arith.constant 0 : i32
    %c0_i32_0 = arith.constant 0 : i32
    %c0_i32_1 = arith.constant 0 : i32
    return %arg0, %c0_i32, %c0_i32_0 : i32, i32, i32
  }
  func.func @transform_5(%arg0: i32) -> (i32, i32, i32) {
    %c0_i32 = arith.constant 0 : i32
    %c0_i32_0 = arith.constant 0 : i32
    %c0_i32_1 = arith.constant 0 : i32
    return %arg0, %c0_i32, %c0_i32_0 : i32, i32, i32
  }
  func.func @transform_6(%arg0: i32) -> (i32, i32, i32) {
    %c0_i32 = arith.constant 0 : i32
    %c0_i32_0 = arith.constant 0 : i32
    %c0_i32_1 = arith.constant 0 : i32
    return %arg0, %c0_i32, %c0_i32_0 : i32, i32, i32
  }
}

</mosaic_0001>

<llo_original>
// kernel: medical_phobert_forward.8
$region0: #{medical_phobert_forward.8}
  #allocation0 [shape = 'u32[]', space=smem, size = 0x4, offset = 0x4, fixed_abs, tag = 'smem constant byte address 0x4 - core index']
  #allocation1 [shape = 'u32[144,128]{1,0:T(1,128)}', space=vmem, size = 0x12000, scoped, tag = 'internal scratch']
  %s0 = inlined_call_operand.vmem [shape: f32[2,8,32], index: 0, kind: input, shape index: {}]
  %s1 = inlined_call_operand.vmem [shape: bf16[32,64], index: 1, kind: input, shape index: {}]
  %s2 = inlined_call_operand.vmem [shape: f32[1,64], index: 2, kind: input, shape index: {}]
  %s3 = inlined_call_operand.vmem [shape: bf16[64,32], index: 3, kind: input, shape index: {}]
  %s4 = inlined_call_operand.vmem [shape: f32[1,32], index: 4, kind: input, shape index: {}]
  %s5 = inlined_call_operand.vmem [shape: f32[1,32], index: 5, kind: input, shape index: {}]
  %s6 = inlined_call_operand.vmem [shape: f32[1,32], index: 6, kind: input, shape index: {}]
  %s7 = inlined_call_operand.vmem [shape: f32[2,8,32], index: 7, kind: output, shape index: {}]
  %s8 = sld [smem:[#allocation0]]
  $region61: #{medical_phobert_forward.8} parent=0
    _
  %s10 = ssub.s32 1, %s8
  %s11 = scalar_select 0, %s10, %s8
  loop: start=0, step=1, limit=4
  $region2: #{medical_phobert_forward.8} parent=0 // loop_pre_header
    _
  $region3: #{medical_phobert_forward.8} parent=0 // loop_header
    %s13 = sphi 0, %s17
    %p14 = scmp.ge.s32.totalorder %s13, 4
    %s23 = sphi 0, %s25
    %s26 = sphi 0, %s23
    %s27 = sphi 0, %s26
    %s43 = sphi 0, %s27
    %s47 = sphi 0, %s47
    %s49 = sphi 0, %s47
    %s50 = sphi 0, %s49
    %s64 = sphi 0, %s50
    %s68 = sphi 0, %s68
    %s70 = sphi 0, %s68
    %s71 = sphi 0, %s70
    %s85 = sphi 0, %s71
    %s89 = sphi 0, %s89
    %s91 = sphi 0, %s89
    %s92 = sphi 0, %s91
    %s106 = sphi 0, %s92
    %s110 = sphi 0, %s110
    %s112 = sphi 0, %s110
    %s113 = sphi 0, %s112
    %s127 = sphi 0, %s113
    %s131 = sphi 0, %s131
    %s133 = sphi 0, %s131
    %s134 = sphi 0, %s133
    %s148 = sphi 0, %s134
    %s152 = sphi 0, %s152
    %s154 = sphi 0, %s152
    %s155 = sphi 0, %s154
    %s169 = sphi 0, %s155
    %s175 = sphi 0, %s177
    %s178 = sphi 0, %s175
    %s179 = sphi 0, %s178
    %s195 = sphi 0, %s179
  $region4: #{medical_phobert_forward.8} parent=0 // loop_header_branch
    %16 = sbr.rel (%p14) target = $region8
  $region5: #{medical_phobert_forward.8} parent=0 // loop_body
    %s18 = ssub.s32 %s13, 1
    %s19 = ssub.s32 %s13, 2
    %s20 = sadd.s32 %s13, 1
    %s21 = ssub.s32 %s13, %s20
    %p22 = scmp.eq.s32.totalorder %s21, 0
    %s24 = sadd.s32 %s23, 1
    %s25 = scalar_select %p22, %s23, %s24
    %p28 = pneg %p22
    %p29 = scmp.eq.s32.totalorder %s13, 1
    %p30 = por %p28, %p29
    %p31 = scmp.ne.s32.totalorder %s23, %s26
    %p32 = scmp.eq.s32.totalorder %s13, 0
    %p33 = por %p31, %p32
    %p34 = scmp.ne.s32.totalorder %s23, %s26
    %p35 = scmp.eq.s32.totalorder %s18, 1
    %p36 = por %p34, %p35
    %p37 = scmp.ne.s32.totalorder %s26, %s27
    %p38 = scmp.eq.s32.totalorder %s18, 0
    %p39 = por %p37, %p38
    %p40 = scmp.ne.s32.totalorder %s26, %s27
    %p41 = scmp.eq.s32.totalorder %s19, 1
    %p42 = por %p40, %p41
    %p44 = scmp.ne.s32.totalorder %s27, %s43
    %p45 = scmp.eq.s32.totalorder %s19, 0
    %p46 = por %p44, %p45
    %s48 = sadd.s32 %s47, 1
    %p51 = scmp.eq.s32.totalorder %s13, 1
    %p52 = scmp.ne.s32.totalorder %s47, %s49
    %p53 = scmp.eq.s32.totalorder %s13, 0
    %p54 = por %p52, %p53
    %p55 = scmp.ne.s32.totalorder %s47, %s49
    %p56 = scmp.eq.s32.totalorder %s18, 1
    %p57 = por %p55, %p56
    %p58 = scmp.ne.s32.totalorder %s49, %s50
    %p59 = scmp.eq.s32.totalorder %s18, 0
    %p60 = por %p58, %p59
    %p61 = scmp.ne.s32.totalorder %s49, %s50
    %p62 = scmp.eq.s32.totalorder %s19, 1
    %p63 = por %p61, %p62
    %p65 = scmp.ne.s32.totalorder %s50, %s64
    %p66 = scmp.eq.s32.totalorder %s19, 0
    %p67 = por %p65, %p66
    %s69 = sadd.s32 %s68, 1
    %p72 = scmp.eq.s32.totalorder %s13, 1
    %p73 = scmp.ne.s32.totalorder %s68, %s70
    %p74 = scmp.eq.s32.totalorder %s13, 0
    %p75 = por %p73, %p74
    %p76 = scmp.ne.s32.totalorder %s68, %s70
    %p77 = scmp.eq.s32.totalorder %s18, 1
    %p78 = por %p76, %p77
    %p79 = scmp.ne.s32.totalorder %s70, %s71
    %p80 = scmp.eq.s32.totalorder %s18, 0
    %p81 = por %p79, %p80
    %p82 = scmp.ne.s32.totalorder %s70, %s71
    %p83 = scmp.eq.s32.totalorder %s19, 1
    %p84 = por %p82, %p83
    %p86 = scmp.ne.s32.totalorder %s71, %s85
    %p87 = scmp.eq.s32.totalorder %s19, 0
    %p88 = por %p86, %p87
    %s90 = sadd.s32 %s89, 1
    %p93 = scmp.eq.s32.totalorder %s13, 1
    %p94 = scmp.ne.s32.totalorder %s89, %s91
    %p95 = scmp.eq.s32.totalorder %s13, 0
    %p96 = por %p94, %p95
    %p97 = scmp.ne.s32.totalorder %s89, %s91
    %p98 = scmp.eq.s32.totalorder %s18, 1
    %p99 = por %p97, %p98
    %p100 = scmp.ne.s32.totalorder %s91, %s92
    %p101 = scmp.eq.s32.totalorder %s18, 0
    %p102 = por %p100, %p101
    %p103 = scmp.ne.s32.totalorder %s91, %s92
    %p104 = scmp.eq.s32.totalorder %s19, 1
    %p105 = por %p103, %p104
    %p107 = scmp.ne.s32.totalorder %s92, %s106
    %p108 = scmp.eq.s32.totalorder %s19, 0
    %p109 = por %p107, %p108
    %s111 = sadd.s32 %s110, 1
    %p114 = scmp.eq.s32.totalorder %s13, 1
    %p115 = scmp.ne.s32.totalorder %s110, %s112
    %p116 = scmp.eq.s32.totalorder %s13, 0
    %p117 = por %p115, %p116
    %p118 = scmp.ne.s32.totalorder %s110, %s112
    %p119 = scmp.eq.s32.totalorder %s18, 1
    %p120 = por %p118, %p119
    %p121 = scmp.ne.s32.totalorder %s112, %s113
    %p122 = scmp.eq.s32.totalorder %s18, 0
    %p123 = por %p121, %p122
    %p124 = scmp.ne.s32.totalorder %s112, %s113
    %p125 = scmp.eq.s32.totalorder %s19, 1
    %p126 = por %p124, %p125
    %p128 = scmp.ne.s32.totalorder %s113, %s127
    %p129 = scmp.eq.s32.totalorder %s19, 0
    %p130 = por %p128, %p129
    %s132 = sadd.s32 %s131, 1
    %p135 = scmp.eq.s32.totalorder %s13, 1
    %p136 = scmp.ne.s32.totalorder %s131, %s133
    %p137 = scmp.eq.s32.totalorder %s13, 0
    %p138 = por %p136, %p137
    %p139 = scmp.ne.s32.totalorder %s131, %s133
    %p140 = scmp.eq.s32.totalorder %s18, 1
    %p141 = por %p139, %p140
    %p142 = scmp.ne.s32.totalorder %s133, %s134
    %p143 = scmp.eq.s32.totalorder %s18, 0
    %p144 = por %p142, %p143
    %p145 = scmp.ne.s32.totalorder %s133, %s134
    %p146 = scmp.eq.s32.totalorder %s19, 1
    %p147 = por %p145, %p146
    %p149 = scmp.ne.s32.totalorder %s134, %s148
    %p150 = scmp.eq.s32.totalorder %s19, 0
    %p151 = por %p149, %p150
    %s153 = sadd.s32 %s152, 1
    %p156 = scmp.eq.s32.totalorder %s13, 1
    %p157 = scmp.ne.s32.totalorder %s152, %s154
    %p158 = scmp.eq.s32.totalorder %s13, 0
    %p159 = por %p157, %p158
    %p160 = scmp.ne.s32.totalorder %s152, %s154
    %p161 = scmp.eq.s32.totalorder %s18, 1
    %p162 = por %p160, %p161
    %p163 = scmp.ne.s32.totalorder %s154, %s155
    %p164 = scmp.eq.s32.totalorder %s18, 0
    %p165 = por %p163, %p164
    %p166 = scmp.ne.s32.totalorder %s154, %s155
    %p167 = scmp.eq.s32.totalorder %s19, 1
    %p168 = por %p166, %p167
    %p170 = scmp.ne.s32.totalorder %s155, %s169
    %p171 = scmp.eq.s32.totalorder %s19, 0
    %p172 = por %p170, %p171
    %s173 = ssub.s32 %s13, %s20
    %p174 = scmp.eq.s32.totalorder %s173, 0
    %s176 = sadd.s32 %s175, 1
    %s177 = scalar_select %p174, %s175, %s176
    %p180 = pneg %p174
    %p181 = scmp.eq.s32.totalorder %s13, 1
    %p182 = por %p180, %p181
    %p183 = scmp.ne.s32.totalorder %s175, %s178
    %p184 = scmp.eq.s32.totalorder %s13, 0
    %p185 = por %p183, %p184
    %p186 = scmp.ne.s32.totalorder %s175, %s178
    %p187 = scmp.eq.s32.totalorder %s18, 1
    %p188 = por %p186, %p187
    %p189 = scmp.ne.s32.totalorder %s178, %s179
    %p190 = scmp.eq.s32.totalorder %s18, 0
    %p191 = por %p189, %p190
    %p192 = scmp.ne.s32.totalorder %s178, %s179
    %p193 = scmp.eq.s32.totalorder %s19, 1
    %p194 = por %p192, %p193
    %p196 = scmp.ne.s32.totalorder %s179, %s195
    %p197 = scmp.eq.s32.totalorder %s19, 0
    %p198 = por %p196, %p197
    %p199 = scmp.le.s32.totalorder 1, %s13
    %p200 = scmp.lt.s32.totalorder %s13, 3
    %p201 = pnand %p199, %p200
    %p202 = pneg %p201
    // Predicated region
    $region9: #{medical_phobert_forward.8} parent=5 // pred_check
      _
    $region10: #{medical_phobert_forward.8} parent=5 // pred_check_branch
      %204 = sbr.rel (%p201) target = $region12
    $region11: #{medical_phobert_forward.8} parent=5 // pred_region
      %s205 = ssub.s32 %s13, 1
      // Predicated region
      $region13: #{medical_phobert_forward.8} parent=11 // pred_check
        %p206 = pneg %p60
      $region14: #{medical_phobert_forward.8} parent=11 // pred_check_branch
        %208 = sbr.rel (%p206) target = $region16
      $region15: #{medical_phobert_forward.8} parent=11 // pred_region
        _
      $region16: #{medical_phobert_forward.8} parent=11 // pred_fallthru
        _
      // Predicated region
      $region17: #{medical_phobert_forward.8} parent=11 // pred_check
        %p209 = pneg %p81
      $region18: #{medical_phobert_forward.8} parent=11 // pred_check_branch
        %211 = sbr.rel (%p209) target = $region20
      $region19: #{medical_phobert_forward.8} parent=11 // pred_region
        _
      $region20: #{medical_phobert_forward.8} parent=11 // pred_fallthru
        _
      // Predicated region
      $region21: #{medical_phobert_forward.8} parent=11 // pred_check
        %p212 = pneg %p102
      $region22: #{medical_phobert_forward.8} parent=11 // pred_check_branch
        %214 = sbr.rel (%p212) target = $region24
      $region23: #{medical_phobert_forward.8} parent=11 // pred_region
        _
      $region24: #{medical_phobert_forward.8} parent=11 // pred_fallthru
        _
      // Predicated region
      $region25: #{medical_phobert_forward.8} parent=11 // pred_check
        %p215 = pneg %p123
      $region26: #{medical_phobert_forward.8} parent=11 // pred_check_branch
        %217 = sbr.rel (%p215) target = $region28
      $region27: #{medical_phobert_forward.8} parent=11 // pred_region
        _
      $region28: #{medical_phobert_forward.8} parent=11 // pred_fallthru
        _
      // Predicated region
      $region29: #{medical_phobert_forward.8} parent=11 // pred_check
        %p218 = pneg %p144
      $region30: #{medical_phobert_forward.8} parent=11 // pred_check_branch
        %220 = sbr.rel (%p218) target = $region32
      $region31: #{medical_phobert_forward.8} parent=11 // pred_region
        _
      $region32: #{medical_phobert_forward.8} parent=11 // pred_fallthru
        _
      // Predicated region
      $region33: #{medical_phobert_forward.8} parent=11 // pred_check
        %p221 = pneg %p165
      $region34: #{medical_phobert_forward.8} parent=11 // pred_check_branch
        %223 = sbr.rel (%p221) target = $region36
      $region35: #{medical_phobert_forward.8} parent=11 // pred_region
        _
      $region36: #{medical_phobert_forward.8} parent=11 // pred_fallthru
        _
    $region12: #{medical_phobert_forward.8} parent=5 // pred_fallthru
      _
    %p224 = scmp.lt.s32.totalorder %s13, 2
    // Predicated region
    $region37: #{medical_phobert_forward.8} parent=5 // pred_check
      %p225 = pneg %p224
    $region38: #{medical_phobert_forward.8} parent=5 // pred_check_branch
      %227 = sbr.rel (%p225) target = $region40
    $region39: #{medical_phobert_forward.8} parent=5 // pred_region
      // Predicated region
      $region41: #{medical_phobert_forward.8} parent=39 // pred_check
        %p228 = pneg %p33
      $region42: #{medical_phobert_forward.8} parent=39 // pred_check_branch
        %230 = sbr.rel (%p228) target = $region44
      $region43: #{medical_phobert_forward.8} parent=39 // pred_region
        %p231 = scmp.lt.s32.totalorder %s13, 1
        %s232 = scalar_select %p231, %s13, 1
        %s233 = smul.addr %s232, 8
        %s234 = scalar_lea.vmem %s0, %s233
      $region44: #{medical_phobert_forward.8} parent=39 // pred_fallthru
        _
    $region40: #{medical_phobert_forward.8} parent=5 // pred_fallthru
      _
    %p235 = scmp.le.s32.totalorder 1, %s13
    %p236 = scmp.lt.s32.totalorder %s13, 3
    %p237 = pnand %p235, %p236
    %p238 = pneg %p237
    // Predicated region
    $region45: #{medical_phobert_forward.8} parent=5 // pred_check
      _
    $region46: #{medical_phobert_forward.8} parent=5 // pred_check_branch
      %240 = sbr.rel (%p237) target = $region48
    $region47: #{medical_phobert_forward.8} parent=5 // pred_region
      %s241 = ssub.s32 %s13, 1
      %p242 = scmp.lt.s32.totalorder %s18, 1
      %s243 = scalar_select %p242, %s18, 1
      %s244 = smul.addr %s243, 8
      %s245 = scalar_lea.vmem %s0, %s244
      %p246 = pneg %p39
      %p247 = pneg %p36
      %p248 = pneg %p60
      %p249 = pneg %p57
      %p250 = pneg %p81
      %p251 = pneg %p78
      %p252 = pneg %p102
      %p253 = pneg %p99
      %p254 = pneg %p123
      %p255 = pneg %p120
      %p256 = pneg %p144
      %p257 = pneg %p141
      %p258 = pneg %p165
      %p259 = pneg %p162
      %p260 = pneg %p191
      %p261 = pneg %p188
      %p262 = scmp.lt.s32.totalorder %s18, 1
      %s263 = scalar_select %p262, %s18, 1
      %s264 = smul.addr %s263, 8
      %s265 = scalar_lea.vmem %s7, %s264
      %p266 = scmp.lt.s32.totalorder %s18, 1
      %s267 = scalar_select %p266, %s18, 1
      %s268 = smul.addr %s267, 8
      %s269 = scalar_lea.vmem %s0, %s268
      %p270 = scmp.lt.s32.totalorder %s18, 1
      %s271 = scalar_select %p270, %s18, 1
      %s272 = smul.addr %s271, 8
      %s273 = scalar_lea.vmem %s7, %s272
      %v275 = vld [vmem:[%s269] sm:$0xff]
      %v276 = vpack.c.bf16 %v275, %v275
      %v277 = vld [vmem:[%s1] sm:$0xf]
      %v278 = vld [vmem:[%s1 + $0x4] sm:$0xf]
      %v279 = vld [vmem:[%s1 + $0x8] sm:$0xf]
      %v280 = vld [vmem:[%s1 + $0xc] sm:$0xf]
      %v281 = vld [vmem:[%s2] sm:$0x1]
      %v283 = vlaneseq
      %v284 = vshrl.u32 %v283, 7
      %v285 = vsub.s32 0, %v284
      %v286 = vrot.slane %v281, %v285
      %v292 = vunpack.c.l.b16 %v277
      %v293 = vunpack.c.l.b16 %v278
      %v294 = vunpack.c.l.b16 %v279
      %v295 = vunpack.c.l.b16 %v280
      %v296 = vpack.c.b16 %v293, %v292
      %v297 = vpack.c.b16 %v295, %v294
      %vm300 = vcmask 261120
      %v302 = vsel %vm300, %v276, 0
      %304 = vmatprep.subr.bf16.mxu0 0
      %305 = vmatpush1.bf16.msra.mxu0 %v296
      %306 = vmatprep.subr.bf16.mxu0 0
      %307 = vmatpush1.bf16.msra.mxu0 %v297
      %308 = vmatprep.subr.bf16.mxu0 0
      %309 = vmatpush1.bf16.msra.mxu0 0
      %310 = vmatprep.subr.bf16.mxu0 0
      %311 = vmatpush1.bf16.msra.mxu0 0
      %312 = vmatprep.subr.bf16.mxu0 0
      %313 = vmatpush1.bf16.msra.mxu0 0
      %314 = vmatprep.subr.bf16.mxu0 0
      %315 = vmatpush1.bf16.msra.mxu0 0
      %316 = vmatprep.subr.bf16.mxu0 0
      %317 = vmatpush1.bf16.msra.mxu0 0
      %318 = vmatprep.subr.bf16.mxu0 0
      %319 = vmatpush1.bf16.msra.mxu0 0
      %320 = vmatprep.subr.bf16.mxu0 0
      %321 = vmatpush1.bf16.msra.mxu0 0
      %322 = vmatprep.subr.bf16.mxu0 0
      %323 = vmatpush1.bf16.msra.mxu0 0
      %324 = vmatprep.subr.bf16.mxu0 0
      %325 = vmatpush1.bf16.msra.mxu0 0
      %326 = vmatprep.subr.bf16.mxu0 0
      %327 = vmatpush1.bf16.msra.mxu0 0
      %328 = vmatprep.subr.bf16.mxu0 0
      %329 = vmatpush1.bf16.msra.mxu0 0
      %330 = vmatprep.subr.bf16.mxu0 0
      %331 = vmatpush1.bf16.msra.mxu0 0
      %332 = vmatprep.subr.bf16.mxu0 0
      %333 = vmatpush1.bf16.msra.mxu0 0
      %334 = vmatprep.subr.bf16.mxu0 0
      %335 = vmatpush1.bf16.msra.mxu0 0
      %336 = vmatprep.mubr.bf16.mxu0 0
      %337 = vmatmul.mubr.bf16.gmra.mrb[0].mxu0 %v302
      %v338 = vpop.f32.mrb[0].mxu0
      %v339 = vadd.f32 %v286, %v338
      %v340 = vpop.f32.mrb[0].mxu0
      %v341 = vpop.f32.mrb[0].mxu0
      %v342 = vpop.f32.mrb[0].mxu0
      %343 = vdwg.mxu0
      %v344 = vmul.f32 %v339, 0.5
      %v345 = vmul.f32 %v339, 0.044715
      %v346 = vmul.f32 %v345, %v339
      %v347 = vmul.f32 %v346, %v339
      %v348 = vadd.f32 %v339, %v347
      %v349 = vmul.f32 %v348, 0.7978846
      %v350 = vtanh.pop %v349
      %v351 = vadd.f32 %v350, 1.0
      %v352 = vmul.f32 %v344, %v351
      %v353 = vpack.c.bf16 %v352, %v352
      %v354 = vld [vmem:[%s3] sm:$0xf]
      %v355 = vld [vmem:[%s3 + $0x4] sm:$0xf]
      %v356 = vld [vmem:[%s3 + $0x8] sm:$0xf]
      %v357 = vld [vmem:[%s3 + $0xc] sm:$0xf]
      %v358 = vld [vmem:[%s3 + $0x10] sm:$0xf]
      %v359 = vld [vmem:[%s3 + $0x14] sm:$0xf]
      %v360 = vld [vmem:[%s3 + $0x18] sm:$0xf]
      %v361 = vld [vmem:[%s3 + $0x1c] sm:$0xf]
      %v362 = vld [vmem:[%s4] sm:$0x1]
      %v364 = vlaneseq
      %v365 = vshrl.u32 %v364, 7
      %v366 = vsub.s32 0, %v365
      %v367 = vrot.slane %v362, %v366
      %v377 = vunpack.c.l.b16 %v354
      %v378 = vunpack.c.l.b16 %v355
      %v379 = vunpack.c.l.b16 %v356
      %v380 = vunpack.c.l.b16 %v357
      %v381 = vunpack.c.l.b16 %v358
      %v382 = vunpack.c.l.b16 %v359
      %v383 = vunpack.c.l.b16 %v360
      %v384 = vunpack.c.l.b16 %v361
      %v385 = vpack.c.b16 %v378, %v377
      %v386 = vpack.c.b16 %v380, %v379
      %v387 = vpack.c.b16 %v382, %v381
      %v388 = vpack.c.b16 %v384, %v383
      %vm393 = vcmask 523264
      %v395 = vsel %vm393, %v353, 0
      %397 = vmatprep.subr.bf16.mxu0 0
      %398 = vmatpush1.bf16.msra.mxu0 %v385
      %399 = vmatprep.subr.bf16.mxu0 0
      %400 = vmatpush1.bf16.msra.mxu0 %v386
      %401 = vmatprep.subr.bf16.mxu0 0
      %402 = vmatpush1.bf16.msra.mxu0 %v387
      %403 = vmatprep.subr.bf16.mxu0 0
      %404 = vmatpush1.bf16.msra.mxu0 %v388
      %405 = vmatprep.subr.bf16.mxu0 0
      %406 = vmatpush1.bf16.msra.mxu0 0
      %407 = vmatprep.subr.bf16.mxu0 0
      %408 = vmatpush1.bf16.msra.mxu0 0
      %409 = vmatprep.subr.bf16.mxu0 0
      %410 = vmatpush1.bf16.msra.mxu0 0
      %411 = vmatprep.subr.bf16.mxu0 0
      %412 = vmatpush1.bf16.msra.mxu0 0
      %413 = vmatprep.subr.bf16.mxu0 0
      %414 = vmatpush1.bf16.msra.mxu0 0
      %415 = vmatprep.subr.bf16.mxu0 0
      %416 = vmatpush1.bf16.msra.mxu0 0
      %417 = vmatprep.subr.bf16.mxu0 0
      %418 = vmatpush1.bf16.msra.mxu0 0
      %419 = vmatprep.subr.bf16.mxu0 0
      %420 = vmatpush1.bf16.msra.mxu0 0
      %421 = vmatprep.subr.bf16.mxu0 0
      %422 = vmatpush1.bf16.msra.mxu0 0
      %423 = vmatprep.subr.bf16.mxu0 0
      %424 = vmatpush1.bf16.msra.mxu0 0
      %425 = vmatprep.subr.bf16.mxu0 0
      %426 = vmatpush1.bf16.msra.mxu0 0
      %427 = vmatprep.subr.bf16.mxu0 0
      %428 = vmatpush1.bf16.msra.mxu0 0
      %429 = vmatprep.mubr.bf16.mxu0 0
      %430 = vmatmul.mubr.bf16.gmra.mrb[0].mxu0 %v395
      %v431 = vpop.f32.mrb[0].mxu0
      %v432 = vadd.f32 %v367, %v431
      %v433 = vpop.f32.mrb[0].mxu0
      %v434 = vpop.f32.mrb[0].mxu0
      %v435 = vpop.f32.mrb[0].mxu0
      %436 = vdwg.mxu0
      %v437 = vadd.f32 %v432, %v275
      %v438 = vld [vmem:[%s5] sm:$0x1]
      %v439 = vld [vmem:[%s6] sm:$0x1]
      %v440 = vsel %vm300, %v437, 0.0
      %441 = vadd.xlane.f32.xlu0 %v440
      %v442 = vpop.xlane.xlu0 %441
      %v443 = vrcp.pop 32.0
      %v444 = vmul.f32 %v442, %v443
      %v445 = vsub.f32 %v437, %v444
      %v446 = vmul.f32 %v445, %v445
      %v447 = vsel %vm300, %v446, 0.0
      %448 = vadd.xlane.f32.xlu0 %v447
      %v449 = vpop.xlane.xlu0 %448
      %v450 = vmul.f32 %v449, %v443
      %v451 = vadd.f32 %v450, 1e-05
      %v452 = vrsqrt.pop %v451
      %v453 = vmul.f32 %v445, %v452
      %v455 = vlaneseq
      %v456 = vshrl.u32 %v455, 7
      %v457 = vsub.s32 0, %v456
      %v458 = vrot.slane %v438, %v457
      %v460 = vmul.f32 %v453, %v458
      %v462 = vlaneseq
      %v463 = vshrl.u32 %v462, 7
      %v464 = vsub.s32 0, %v463
      %v465 = vrot.slane %v439, %v464
      %v467 = vadd.f32 %v460, %v465
      %468 = vst.msk [vmem:[%s273] sm:$0xff] %vm300, %v467
      %p469 = scmp.lt.s32.totalorder %s18, 1
      %s470 = scalar_select %p469, %s18, 1
      %s471 = smul.addr %s470, 8
      %s472 = scalar_lea.vmem %s7, %s471
      // Predicated region
      $region49: #{medical_phobert_forward.8} parent=47 // pred_check
        %p473 = pneg %p188
      $region50: #{medical_phobert_forward.8} parent=47 // pred_check_branch
        %475 = sbr.rel (%p473) target = $region52
      $region51: #{medical_phobert_forward.8} parent=47 // pred_region
        _
      $region52: #{medical_phobert_forward.8} parent=47 // pred_fallthru
        _
    $region48: #{medical_phobert_forward.8} parent=5 // pred_fallthru
      _
    %p476 = scmp.le.s32.totalorder 2, %s13
    // Predicated region
    $region53: #{medical_phobert_forward.8} parent=5 // pred_check
      %p477 = pneg %p476
    $region54: #{medical_phobert_forward.8} parent=5 // pred_check_branch
      %479 = sbr.rel (%p477) target = $region56
    $region55: #{medical_phobert_forward.8} parent=5 // pred_region
      %s480 = ssub.s32 %s13, 2
      // Predicated region
      $region57: #{medical_phobert_forward.8} parent=55 // pred_check
        %p481 = pneg %p194
      $region58: #{medical_phobert_forward.8} parent=55 // pred_check_branch
        %483 = sbr.rel (%p481) target = $region60
      $region59: #{medical_phobert_forward.8} parent=55 // pred_region
        %p484 = scmp.lt.s32.totalorder %s19, 1
        %s485 = scalar_select %p484, %s19, 1
        %s486 = smul.addr %s485, 8
        %s487 = scalar_lea.vmem %s7, %s486
      $region60: #{medical_phobert_forward.8} parent=55 // pred_fallthru
        _
    $region56: #{medical_phobert_forward.8} parent=5 // pred_fallthru
      _
  $region6: #{medical_phobert_forward.8} parent=0 // loop_footer
    %s17 = sadd.s32 1, %s13
  $region7: #{medical_phobert_forward.8} parent=0 // loop_footer_branch
    %12 = sbr.rel target = $region3
  $region8: #{medical_phobert_forward.8} parent=0 // loop_exit
    _

// kernel: medical_phobert_forward.6
$region0: #{medical_phobert_forward.6}
  #allocation0 [shape = 'u32[]', space=smem, size = 0x4, offset = 0x4, fixed_abs, tag = 'smem constant byte address 0x4 - core index']
  #allocation1 [shape = 'u32[144,128]{1,0:T(1,128)}', space=vmem, size = 0x12000, scoped, tag = 'internal scratch']
  %s0 = inlined_call_operand.vmem [shape: f32[2,8,32], index: 0, kind: input, shape index: {}]
  %s1 = inlined_call_operand.vmem [shape: f32[1,32], index: 1, kind: input, shape index: {}]
  %s2 = inlined_call_operand.vmem [shape: f32[1,32], index: 2, kind: input, shape index: {}]
  %s3 = inlined_call_operand.vmem [shape: f32[2,8,32], index: 3, kind: output, shape index: {}]
  %s4 = sld [smem:[#allocation0]]
  $region45: #{medical_phobert_forward.6} parent=0
    _
  %s6 = ssub.s32 1, %s4
  %s7 = scalar_select 0, %s6, %s4
  loop: start=0, step=1, limit=4
  $region2: #{medical_phobert_forward.6} parent=0 // loop_pre_header
    _
  $region3: #{medical_phobert_forward.6} parent=0 // loop_header
    %s9 = sphi 0, %s13
    %p10 = scmp.ge.s32.totalorder %s9, 4
    %s19 = sphi 0, %s21
    %s22 = sphi 0, %s19
    %s23 = sphi 0, %s22
    %s39 = sphi 0, %s23
    %s43 = sphi 0, %s43
    %s45 = sphi 0, %s43
    %s46 = sphi 0, %s45
    %s60 = sphi 0, %s46
    %s64 = sphi 0, %s64
    %s66 = sphi 0, %s64
    %s67 = sphi 0, %s66
    %s81 = sphi 0, %s67
    %s87 = sphi 0, %s89
    %s90 = sphi 0, %s87
    %s91 = sphi 0, %s90
    %s107 = sphi 0, %s91
  $region4: #{medical_phobert_forward.6} parent=0 // loop_header_branch
    %12 = sbr.rel (%p10) target = $region8
  $region5: #{medical_phobert_forward.6} parent=0 // loop_body
    %s14 = ssub.s32 %s9, 1
    %s15 = ssub.s32 %s9, 2
    %s16 = sadd.s32 %s9, 1
    %s17 = ssub.s32 %s9, %s16
    %p18 = scmp.eq.s32.totalorder %s17, 0
    %s20 = sadd.s32 %s19, 1
    %s21 = scalar_select %p18, %s19, %s20
    %p24 = pneg %p18
    %p25 = scmp.eq.s32.totalorder %s9, 1
    %p26 = por %p24, %p25
    %p27 = scmp.ne.s32.totalorder %s19, %s22
    %p28 = scmp.eq.s32.totalorder %s9, 0
    %p29 = por %p27, %p28
    %p30 = scmp.ne.s32.totalorder %s19, %s22
    %p31 = scmp.eq.s32.totalorder %s14, 1
    %p32 = por %p30, %p31
    %p33 = scmp.ne.s32.totalorder %s22, %s23
    %p34 = scmp.eq.s32.totalorder %s14, 0
    %p35 = por %p33, %p34
    %p36 = scmp.ne.s32.totalorder %s22, %s23
    %p37 = scmp.eq.s32.totalorder %s15, 1
    %p38 = por %p36, %p37
    %p40 = scmp.ne.s32.totalorder %s23, %s39
    %p41 = scmp.eq.s32.totalorder %s15, 0
    %p42 = por %p40, %p41
    %s44 = sadd.s32 %s43, 1
    %p47 = scmp.eq.s32.totalorder %s9, 1
    %p48 = scmp.ne.s32.totalorder %s43, %s45
    %p49 = scmp.eq.s32.totalorder %s9, 0
    %p50 = por %p48, %p49
    %p51 = scmp.ne.s32.totalorder %s43, %s45
    %p52 = scmp.eq.s32.totalorder %s14, 1
    %p53 = por %p51, %p52
    %p54 = scmp.ne.s32.totalorder %s45, %s46
    %p55 = scmp.eq.s32.totalorder %s14, 0
    %p56 = por %p54, %p55
    %p57 = scmp.ne.s32.totalorder %s45, %s46
    %p58 = scmp.eq.s32.totalorder %s15, 1
    %p59 = por %p57, %p58
    %p61 = scmp.ne.s32.totalorder %s46, %s60
    %p62 = scmp.eq.s32.totalorder %s15, 0
    %p63 = por %p61, %p62
    %s65 = sadd.s32 %s64, 1
    %p68 = scmp.eq.s32.totalorder %s9, 1
    %p69 = scmp.ne.s32.totalorder %s64, %s66
    %p70 = scmp.eq.s32.totalorder %s9, 0
    %p71 = por %p69, %p70
    %p72 = scmp.ne.s32.totalorder %s64, %s66
    %p73 = scmp.eq.s32.totalorder %s14, 1
    %p74 = por %p72, %p73
    %p75 = scmp.ne.s32.totalorder %s66, %s67
    %p76 = scmp.eq.s32.totalorder %s14, 0
    %p77 = por %p75, %p76
    %p78 = scmp.ne.s32.totalorder %s66, %s67
    %p79 = scmp.eq.s32.totalorder %s15, 1
    %p80 = por %p78, %p79
    %p82 = scmp.ne.s32.totalorder %s67, %s81
    %p83 = scmp.eq.s32.totalorder %s15, 0
    %p84 = por %p82, %p83
    %s85 = ssub.s32 %s9, %s16
    %p86 = scmp.eq.s32.totalorder %s85, 0
    %s88 = sadd.s32 %s87, 1
    %s89 = scalar_select %p86, %s87, %s88
    %p92 = pneg %p86
    %p93 = scmp.eq.s32.totalorder %s9, 1
    %p94 = por %p92, %p93
    %p95 = scmp.ne.s32.totalorder %s87, %s90
    %p96 = scmp.eq.s32.totalorder %s9, 0
    %p97 = por %p95, %p96
    %p98 = scmp.ne.s32.totalorder %s87, %s90
    %p99 = scmp.eq.s32.totalorder %s14, 1
    %p100 = por %p98, %p99
    %p101 = scmp.ne.s32.totalorder %s90, %s91
    %p102 = scmp.eq.s32.totalorder %s14, 0
    %p103 = por %p101, %p102
    %p104 = scmp.ne.s32.totalorder %s90, %s91
    %p105 = scmp.eq.s32.totalorder %s15, 1
    %p106 = por %p104, %p105
    %p108 = scmp.ne.s32.totalorder %s91, %s107
    %p109 = scmp.eq.s32.totalorder %s15, 0
    %p110 = por %p108, %p109
    %p111 = scmp.le.s32.totalorder 1, %s9
    %p112 = scmp.lt.s32.totalorder %s9, 3
    %p113 = pnand %p111, %p112
    %p114 = pneg %p113
    // Predicated region
    $region9: #{medical_phobert_forward.6} parent=5 // pred_check
      _
    $region10: #{medical_phobert_forward.6} parent=5 // pred_check_branch
      %116 = sbr.rel (%p113) target = $region12
    $region11: #{medical_phobert_forward.6} parent=5 // pred_region
      %s117 = ssub.s32 %s9, 1
      // Predicated region
      $region13: #{medical_phobert_forward.6} parent=11 // pred_check
        %p118 = pneg %p56
      $region14: #{medical_phobert_forward.6} parent=11 // pred_check_branch
        %120 = sbr.rel (%p118) target = $region16
      $region15: #{medical_phobert_forward.6} parent=11 // pred_region
        _
      $region16: #{medical_phobert_forward.6} parent=11 // pred_fallthru
        _
      // Predicated region
      $region17: #{medical_phobert_forward.6} parent=11 // pred_check
        %p121 = pneg %p77
      $region18: #{medical_phobert_forward.6} parent=11 // pred_check_branch
        %123 = sbr.rel (%p121) target = $region20
      $region19: #{medical_phobert_forward.6} parent=11 // pred_region
        _
      $region20: #{medical_phobert_forward.6} parent=11 // pred_fallthru
        _
    $region12: #{medical_phobert_forward.6} parent=5 // pred_fallthru
      _
    %p124 = scmp.lt.s32.totalorder %s9, 2
    // Predicated region
    $region21: #{medical_phobert_forward.6} parent=5 // pred_check
      %p125 = pneg %p124
    $region22: #{medical_phobert_forward.6} parent=5 // pred_check_branch
      %127 = sbr.rel (%p125) target = $region24
    $region23: #{medical_phobert_forward.6} parent=5 // pred_region
      // Predicated region
      $region25: #{medical_phobert_forward.6} parent=23 // pred_check
        %p128 = pneg %p29
      $region26: #{medical_phobert_forward.6} parent=23 // pred_check_branch
        %130 = sbr.rel (%p128) target = $region28
      $region27: #{medical_phobert_forward.6} parent=23 // pred_region
        %p131 = scmp.lt.s32.totalorder %s9, 1
        %s132 = scalar_select %p131, %s9, 1
        %s133 = smul.addr %s132, 8
        %s134 = scalar_lea.vmem %s0, %s133
      $region28: #{medical_phobert_forward.6} parent=23 // pred_fallthru
        _
    $region24: #{medical_phobert_forward.6} parent=5 // pred_fallthru
      _
    %p135 = scmp.le.s32.totalorder 1, %s9
    %p136 = scmp.lt.s32.totalorder %s9, 3
    %p137 = pnand %p135, %p136
    %p138 = pneg %p137
    // Predicated region
    $region29: #{medical_phobert_forward.6} parent=5 // pred_check
      _
    $region30: #{medical_phobert_forward.6} parent=5 // pred_check_branch
      %140 = sbr.rel (%p137) target = $region32
    $region31: #{medical_phobert_forward.6} parent=5 // pred_region
      %s141 = ssub.s32 %s9, 1
      %p142 = scmp.lt.s32.totalorder %s14, 1
      %s143 = scalar_select %p142, %s14, 1
      %s144 = smul.addr %s143, 8
      %s145 = scalar_lea.vmem %s0, %s144
      %p146 = pneg %p35
      %p147 = pneg %p32
      %p148 = pneg %p56
      %p149 = pneg %p53
      %p150 = pneg %p77
      %p151 = pneg %p74
      %p152 = pneg %p103
      %p153 = pneg %p100
      %p154 = scmp.lt.s32.totalorder %s14, 1
      %s155 = scalar_select %p154, %s14, 1
      %s156 = smul.addr %s155, 8
      %s157 = scalar_lea.vmem %s3, %s156
      %p158 = scmp.lt.s32.totalorder %s14, 1
      %s159 = scalar_select %p158, %s14, 1
      %s160 = smul.addr %s159, 8
      %s161 = scalar_lea.vmem %s0, %s160
      %p162 = scmp.lt.s32.totalorder %s14, 1
      %s163 = scalar_select %p162, %s14, 1
      %s164 = smul.addr %s163, 8
      %s165 = scalar_lea.vmem %s3, %s164
      %v166 = vld [vmem:[%s161] sm:$0xff]
      %v167 = vld [vmem:[%s1] sm:$0x1]
      %v168 = vld [vmem:[%s2] sm:$0x1]
      %vm169 = vcmask 261120
      %v170 = vsel %vm169, %v166, 0.0
      %171 = vadd.xlane.f32.xlu0 %v170
      %v172 = vpop.xlane.xlu0 %171
      %v173 = vrcp.pop 32.0
      %v174 = vmul.f32 %v172, %v173
      %v175 = vsub.f32 %v166, %v174
      %v176 = vmul.f32 %v175, %v175
      %v177 = vsel %vm169, %v176, 0.0
      %178 = vadd.xlane.f32.xlu0 %v177
      %v179 = vpop.xlane.xlu0 %178
      %v180 = vmul.f32 %v179, %v173
      %v181 = vadd.f32 %v180, 1e-05
      %v182 = vrsqrt.pop %v181
      %v183 = vmul.f32 %v175, %v182
      %v185 = vlaneseq
      %v186 = vshrl.u32 %v185, 7
      %v187 = vsub.s32 0, %v186
      %v188 = vrot.slane %v167, %v187
      %v190 = vmul.f32 %v183, %v188
      %v192 = vlaneseq
      %v193 = vshrl.u32 %v192, 7
      %v194 = vsub.s32 0, %v193
      %v195 = vrot.slane %v168, %v194
      %v197 = vadd.f32 %v190, %v195
      %198 = vst.msk [vmem:[%s165] sm:$0xff] %vm169, %v197
      %p199 = scmp.lt.s32.totalorder %s14, 1
      %s200 = scalar_select %p199, %s14, 1
      %s201 = smul.addr %s200, 8
      %s202 = scalar_lea.vmem %s3, %s201
      // Predicated region
      $region33: #{medical_phobert_forward.6} parent=31 // pred_check
        %p203 = pneg %p100
      $region34: #{medical_phobert_forward.6} parent=31 // pred_check_branch
        %205 = sbr.rel (%p203) target = $region36
      $region35: #{medical_phobert_forward.6} parent=31 // pred_region
        _
      $region36: #{medical_phobert_forward.6} parent=31 // pred_fallthru
        _
    $region32: #{medical_phobert_forward.6} parent=5 // pred_fallthru
      _
    %p206 = scmp.le.s32.totalorder 2, %s9
    // Predicated region
    $region37: #{medical_phobert_forward.6} parent=5 // pred_check
      %p207 = pneg %p206
    $region38: #{medical_phobert_forward.6} parent=5 // pred_check_branch
      %209 = sbr.rel (%p207) target = $region40
    $region39: #{medical_phobert_forward.6} parent=5 // pred_region
      %s210 = ssub.s32 %s9, 2
      // Predicated region
      $region41: #{medical_phobert_forward.6} parent=39 // pred_check
        %p211 = pneg %p106
      $region42: #{medical_phobert_forward.6} parent=39 // pred_check_branch
        %213 = sbr.rel (%p211) target = $region44
      $region43: #{medical_phobert_forward.6} parent=39 // pred_region
        %p214 = scmp.lt.s32.totalorder %s15, 1
        %s215 = scalar_select %p214, %s15, 1
        %s216 = smul.addr %s215, 8
        %s217 = scalar_lea.vmem %s3, %s216
      $region44: #{medical_phobert_forward.6} parent=39 // pred_fallthru
        _
    $region40: #{medical_phobert_forward.6} parent=5 // pred_fallthru
      _
  $region6: #{medical_phobert_forward.6} parent=0 // loop_footer
    %s13 = sadd.s32 1, %s9
  $region7: #{medical_phobert_forward.6} parent=0 // loop_footer_branch
    %8 = sbr.rel target = $region3
  $region8: #{medical_phobert_forward.6} parent=0 // loop_exit
    _

// kernel: medical_phobert_forward.11
$region0: #{medical_phobert_forward.11}
  #allocation0 [shape = 'u32[]', space=smem, size = 0x4, offset = 0x4, fixed_abs, tag = 'smem constant byte address 0x4 - core index']
  #allocation1 [shape = 'u32[144,128]{1,0:T(1,128)}', space=vmem, size = 0x12000, scoped, tag = 'internal scratch']
  %s0 = inlined_call_operand.vmem [shape: f32[2,8,32], index: 0, kind: input, shape index: {}]
  %s1 = inlined_call_operand.vmem [shape: bf16[32,64], index: 1, kind: input, shape index: {}]
  %s2 = inlined_call_operand.vmem [shape: f32[1,64], index: 2, kind: input, shape index: {}]
  %s3 = inlined_call_operand.vmem [shape: s32[2,8,1], index: 3, kind: input, shape index: {}]
  %s4 = inlined_call_operand.hbm [shape: f32[2,8,64], index: 4, kind: output, shape index: {0}]
  %s5 = inlined_call_operand.vmem [shape: f32[2,1,1], index: 5, kind: output, shape index: {1}]
  %s6 = inlined_call_operand.vmem [shape: f32[2,1,1], index: 6, kind: output, shape index: {2}]
  %7 = xla_tuple %s4, %s5, %s6
  %s8 = sld [smem:[#allocation0]]
  $region65: #{medical_phobert_forward.11} parent=0
    _
  %s10 = ssub.s32 1, %s8
  %s11 = scalar_select 0, %s10, %s8
  $region1: #{medical_phobert_forward.11} parent=0
    #allocation2 [shape = 'u8[8192]{0}', space=vmem, size = 0x2000, scoped, tag = 'output window, operand 0']
    #allocation3 [shape = 's32[2]{0}', space=sflag, size = 0x8, scoped, tag = 'scoped memory for medical_phobert_forward.11']
    %12 = vsyncpa [#allocation3], 0
    %s13 = scalar_lea.sflag [#allocation3], 1
    %14 = vsyncpa %s13, 0
    loop: start=0, step=1, limit=4
    $region2: #{medical_phobert_forward.11} parent=1 // loop_pre_header
      _
    $region3: #{medical_phobert_forward.11} parent=1 // loop_header
      %s16 = sphi 0, %s20
      %p17 = scmp.ge.s32.totalorder %s16, 4
      %s26 = sphi 0, %s28
      %s29 = sphi 0, %s26
      %s30 = sphi 0, %s29
      %s46 = sphi 0, %s30
      %s50 = sphi 0, %s50
      %s52 = sphi 0, %s50
      %s53 = sphi 0, %s52
      %s67 = sphi 0, %s53
      %s71 = sphi 0, %s71
      %s73 = sphi 0, %s71
      %s74 = sphi 0, %s73
      %s88 = sphi 0, %s74
      %s94 = sphi 0, %s96
      %s97 = sphi 0, %s94
      %s98 = sphi 0, %s97
      %s114 = sphi 0, %s98
      %s120 = sphi 0, %s122
      %s123 = sphi 0, %s120
      %s124 = sphi 0, %s123
      %s140 = sphi 0, %s124
      %s146 = sphi 0, %s148
      %s149 = sphi 0, %s146
      %s150 = sphi 0, %s149
      %s166 = sphi 0, %s150
      %s172 = sphi 0, %s174
      %s175 = sphi 0, %s172
      %s176 = sphi 0, %s175
      %s192 = sphi 0, %s176
    $region4: #{medical_phobert_forward.11} parent=1 // loop_header_branch
      %19 = sbr.rel (%p17) target = $region8
    $region5: #{medical_phobert_forward.11} parent=1 // loop_body
      %s21 = ssub.s32 %s16, 1
      %s22 = ssub.s32 %s16, 2
      %s23 = sadd.s32 %s16, 1
      %s24 = ssub.s32 %s16, %s23
      %p25 = scmp.eq.s32.totalorder %s24, 0
      %s27 = sadd.s32 %s26, 1
      %s28 = scalar_select %p25, %s26, %s27
      %p31 = pneg %p25
      %p32 = scmp.eq.s32.totalorder %s16, 1
      %p33 = por %p31, %p32
      %p34 = scmp.ne.s32.totalorder %s26, %s29
      %p35 = scmp.eq.s32.totalorder %s16, 0
      %p36 = por %p34, %p35
      %p37 = scmp.ne.s32.totalorder %s26, %s29
      %p38 = scmp.eq.s32.totalorder %s21, 1
      %p39 = por %p37, %p38
      %p40 = scmp.ne.s32.totalorder %s29, %s30
      %p41 = scmp.eq.s32.totalorder %s21, 0
      %p42 = por %p40, %p41
      %p43 = scmp.ne.s32.totalorder %s29, %s30
      %p44 = scmp.eq.s32.totalorder %s22, 1
      %p45 = por %p43, %p44
      %p47 = scmp.ne.s32.totalorder %s30, %s46
      %p48 = scmp.eq.s32.totalorder %s22, 0
      %p49 = por %p47, %p48
      %s51 = sadd.s32 %s50, 1
      %p54 = scmp.eq.s32.totalorder %s16, 1
      %p55 = scmp.ne.s32.totalorder %s50, %s52
      %p56 = scmp.eq.s32.totalorder %s16, 0
      %p57 = por %p55, %p56
      %p58 = scmp.ne.s32.totalorder %s50, %s52
      %p59 = scmp.eq.s32.totalorder %s21, 1
      %p60 = por %p58, %p59
      %p61 = scmp.ne.s32.totalorder %s52, %s53
      %p62 = scmp.eq.s32.totalorder %s21, 0
      %p63 = por %p61, %p62
      %p64 = scmp.ne.s32.totalorder %s52, %s53
      %p65 = scmp.eq.s32.totalorder %s22, 1
      %p66 = por %p64, %p65
      %p68 = scmp.ne.s32.totalorder %s53, %s67
      %p69 = scmp.eq.s32.totalorder %s22, 0
      %p70 = por %p68, %p69
      %s72 = sadd.s32 %s71, 1
      %p75 = scmp.eq.s32.totalorder %s16, 1
      %p76 = scmp.ne.s32.totalorder %s71, %s73
      %p77 = scmp.eq.s32.totalorder %s16, 0
      %p78 = por %p76, %p77
      %p79 = scmp.ne.s32.totalorder %s71, %s73
      %p80 = scmp.eq.s32.totalorder %s21, 1
      %p81 = por %p79, %p80
      %p82 = scmp.ne.s32.totalorder %s73, %s74
      %p83 = scmp.eq.s32.totalorder %s21, 0
      %p84 = por %p82, %p83
      %p85 = scmp.ne.s32.totalorder %s73, %s74
      %p86 = scmp.eq.s32.totalorder %s22, 1
      %p87 = por %p85, %p86
      %p89 = scmp.ne.s32.totalorder %s74, %s88
      %p90 = scmp.eq.s32.totalorder %s22, 0
      %p91 = por %p89, %p90
      %s92 = ssub.s32 %s16, %s23
      %p93 = scmp.eq.s32.totalorder %s92, 0
      %s95 = sadd.s32 %s94, 1
      %s96 = scalar_select %p93, %s94, %s95
      %p99 = pneg %p93
      %p100 = scmp.eq.s32.totalorder %s16, 1
      %p101 = por %p99, %p100
      %p102 = scmp.ne.s32.totalorder %s94, %s97
      %p103 = scmp.eq.s32.totalorder %s16, 0
      %p104 = por %p102, %p103
      %p105 = scmp.ne.s32.totalorder %s94, %s97
      %p106 = scmp.eq.s32.totalorder %s21, 1
      %p107 = por %p105, %p106
      %p108 = scmp.ne.s32.totalorder %s97, %s98
      %p109 = scmp.eq.s32.totalorder %s21, 0
      %p110 = por %p108, %p109
      %p111 = scmp.ne.s32.totalorder %s97, %s98
      %p112 = scmp.eq.s32.totalorder %s22, 1
      %p113 = por %p111, %p112
      %p115 = scmp.ne.s32.totalorder %s98, %s114
      %p116 = scmp.eq.s32.totalorder %s22, 0
      %p117 = por %p115, %p116
      %s118 = ssub.s32 %s16, %s23
      %p119 = scmp.eq.s32.totalorder %s118, 0
      %s121 = sadd.s32 %s120, 1
      %s122 = scalar_select %p119, %s120, %s121
      %p125 = pneg %p119
      %p126 = scmp.eq.s32.totalorder %s16, 1
      %p127 = por %p125, %p126
      %p128 = scmp.ne.s32.totalorder %s120, %s123
      %p129 = scmp.eq.s32.totalorder %s16, 0
      %p130 = por %p128, %p129
      %p131 = scmp.ne.s32.totalorder %s120, %s123
      %p132 = scmp.eq.s32.totalorder %s21, 1
      %p133 = por %p131, %p132
      %p134 = scmp.ne.s32.totalorder %s123, %s124
      %p135 = scmp.eq.s32.totalorder %s21, 0
      %p136 = por %p134, %p135
      %p137 = scmp.ne.s32.totalorder %s123, %s124
      %p138 = scmp.eq.s32.totalorder %s22, 1
      %p139 = por %p137, %p138
      %p141 = scmp.ne.s32.totalorder %s124, %s140
      %p142 = scmp.eq.s32.totalorder %s22, 0
      %p143 = por %p141, %p142
      %s144 = ssub.s32 %s16, %s23
      %p145 = scmp.eq.s32.totalorder %s144, 0
      %s147 = sadd.s32 %s146, 1
      %s148 = scalar_select %p145, %s146, %s147
      %p151 = pneg %p145
      %p152 = scmp.eq.s32.totalorder %s16, 1
      %p153 = por %p151, %p152
      %p154 = scmp.ne.s32.totalorder %s146, %s149
      %p155 = scmp.eq.s32.totalorder %s16, 0
      %p156 = por %p154, %p155
      %p157 = scmp.ne.s32.totalorder %s146, %s149
      %p158 = scmp.eq.s32.totalorder %s21, 1
      %p159 = por %p157, %p158
      %p160 = scmp.ne.s32.totalorder %s149, %s150
      %p161 = scmp.eq.s32.totalorder %s21, 0
      %p162 = por %p160, %p161
      %p163 = scmp.ne.s32.totalorder %s149, %s150
      %p164 = scmp.eq.s32.totalorder %s22, 1
      %p165 = por %p163, %p164
      %p167 = scmp.ne.s32.totalorder %s150, %s166
      %p168 = scmp.eq.s32.totalorder %s22, 0
      %p169 = por %p167, %p168
      %s170 = ssub.s32 %s16, %s23
      %p171 = scmp.eq.s32.totalorder %s170, 0
      %s173 = sadd.s32 %s172, 1
      %s174 = scalar_select %p171, %s172, %s173
      %p177 = pneg %p171
      %p178 = scmp.eq.s32.totalorder %s16, 1
      %p179 = por %p177, %p178
      %p180 = scmp.ne.s32.totalorder %s172, %s175
      %p181 = scmp.eq.s32.totalorder %s16, 0
      %p182 = por %p180, %p181
      %p183 = scmp.ne.s32.totalorder %s172, %s175
      %p184 = scmp.eq.s32.totalorder %s21, 1
      %p185 = por %p183, %p184
      %p186 = scmp.ne.s32.totalorder %s175, %s176
      %p187 = scmp.eq.s32.totalorder %s21, 0
      %p188 = por %p186, %p187
      %p189 = scmp.ne.s32.totalorder %s175, %s176
      %p190 = scmp.eq.s32.totalorder %s22, 1
      %p191 = por %p189, %p190
      %p193 = scmp.ne.s32.totalorder %s176, %s192
      %p194 = scmp.eq.s32.totalorder %s22, 0
      %p195 = por %p193, %p194
      %p196 = scmp.le.s32.totalorder 1, %s16
      %p197 = scmp.lt.s32.totalorder %s16, 3
      %p198 = pnand %p196, %p197
      %p199 = pneg %p198
      // Predicated region
      $region9: #{medical_phobert_forward.11} parent=5 // pred_check
        _
      $region10: #{medical_phobert_forward.11} parent=5 // pred_check_branch
        %201 = sbr.rel (%p198) target = $region12
      $region11: #{medical_phobert_forward.11} parent=5 // pred_region
        %s202 = ssub.s32 %s16, 1
        // Predicated region
        $region13: #{medical_phobert_forward.11} parent=11 // pred_check
          %p203 = pneg %p63
        $region14: #{medical_phobert_forward.11} parent=11 // pred_check_branch
          %205 = sbr.rel (%p203) target = $region16
        $region15: #{medical_phobert_forward.11} parent=11 // pred_region
          _
        $region16: #{medical_phobert_forward.11} parent=11 // pred_fallthru
          _
        // Predicated region
        $region17: #{medical_phobert_forward.11} parent=11 // pred_check
          %p206 = pneg %p84
        $region18: #{medical_phobert_forward.11} parent=11 // pred_check_branch
          %208 = sbr.rel (%p206) target = $region20
        $region19: #{medical_phobert_forward.11} parent=11 // pred_region
          _
        $region20: #{medical_phobert_forward.11} parent=11 // pred_fallthru
          _
      $region12: #{medical_phobert_forward.11} parent=5 // pred_fallthru
        _
      %p209 = scmp.lt.s32.totalorder %s16, 2
      // Predicated region
      $region21: #{medical_phobert_forward.11} parent=5 // pred_check
        %p210 = pneg %p209
      $region22: #{medical_phobert_forward.11} parent=5 // pred_check_branch
        %212 = sbr.rel (%p210) target = $region24
      $region23: #{medical_phobert_forward.11} parent=5 // pred_region
        // Predicated region
        $region25: #{medical_phobert_forward.11} parent=23 // pred_check
          %p213 = pneg %p36
        $region26: #{medical_phobert_forward.11} parent=23 // pred_check_branch
          %215 = sbr.rel (%p213) target = $region28
        $region27: #{medical_phobert_forward.11} parent=23 // pred_region
          %p216 = scmp.lt.s32.totalorder %s16, 1
          %s217 = scalar_select %p216, %s16, 1
          %s218 = smul.addr %s217, 8
          %s219 = scalar_lea.vmem %s0, %s218
        $region28: #{medical_phobert_forward.11} parent=23 // pred_fallthru
          _
        // Predicated region
        $region29: #{medical_phobert_forward.11} parent=23 // pred_check
          %p220 = pneg %p104
        $region30: #{medical_phobert_forward.11} parent=23 // pred_check_branch
          %222 = sbr.rel (%p220) target = $region32
        $region31: #{medical_phobert_forward.11} parent=23 // pred_region
          %p223 = scmp.lt.s32.totalorder %s16, 1
          %s224 = scalar_select %p223, %s16, 1
          %s225 = smul.addr %s224, 8
          %s226 = scalar_lea.vmem %s3, %s225
        $region32: #{medical_phobert_forward.11} parent=23 // pred_fallthru
          _
      $region24: #{medical_phobert_forward.11} parent=5 // pred_fallthru
        _
      %p227 = scmp.le.s32.totalorder 1, %s16
      %p228 = scmp.lt.s32.totalorder %s16, 3
      %p229 = pnand %p227, %p228
      %p230 = pneg %p229
      // Predicated region
      $region33: #{medical_phobert_forward.11} parent=5 // pred_check
        _
      $region34: #{medical_phobert_forward.11} parent=5 // pred_check_branch
        %232 = sbr.rel (%p229) target = $region36
      $region35: #{medical_phobert_forward.11} parent=5 // pred_region
        %s233 = ssub.s32 %s16, 1
        %p234 = scmp.lt.s32.totalorder %s21, 1
        %s235 = scalar_select %p234, %s21, 1
        %s236 = smul.addr %s235, 8
        %s237 = scalar_lea.vmem %s0, %s236
        %p238 = pneg %p42
        %p239 = pneg %p39
        %p240 = pneg %p63
        %p241 = pneg %p60
        %p242 = pneg %p84
        %p243 = pneg %p81
        %p244 = scmp.lt.s32.totalorder %s21, 1
        %s245 = scalar_select %p244, %s21, 1
        %s246 = smul.addr %s245, 8
        %s247 = scalar_lea.vmem %s3, %s246
        %p248 = pneg %p110
        %p249 = pneg %p107
        %p250 = pneg %p136
        %p251 = pneg %p133
        %s252 = sand.u32 %s123, 1
        %s253 = scalar_lea.sflag [#allocation3], %s252
        %s254 = sand.u32 %s123, 1
        %s255 = smul.addr %s254, 8
        %s256 = scalar_lea.vmem [#allocation2], %s255
        %p257 = pneg %p162
        %p258 = pneg %p159
        %p259 = scmp.lt.s32.totalorder %s21, 1
        %s260 = scalar_select %p259, %s21, 1
        %s261 = scalar_lea.vmem %s5, %s260
        %p262 = pneg %p188
        %p263 = pneg %p185
        %p264 = scmp.lt.s32.totalorder %s21, 1
        %s265 = scalar_select %p264, %s21, 1
        %s266 = scalar_lea.vmem %s6, %s265
        %p267 = scmp.lt.s32.totalorder %s21, 1
        %s268 = scalar_select %p267, %s21, 1
        %s269 = smul.addr %s268, 8
        %s270 = scalar_lea.vmem %s0, %s269
        %p271 = scmp.lt.s32.totalorder %s21, 1
        %s272 = scalar_select %p271, %s21, 1
        %s273 = smul.addr %s272, 8
        %s274 = scalar_lea.vmem %s3, %s273
        %p275 = scmp.lt.s32.totalorder %s21, 1
        %s276 = scalar_select %p275, %s21, 1
        %s277 = scalar_lea.vmem %s5, %s276
        %p278 = scmp.lt.s32.totalorder %s21, 1
        %s279 = scalar_select %p278, %s21, 1
        %s280 = scalar_lea.vmem %s6, %s279
        %v282 = vld [vmem:[%s270] sm:$0xff]
        %v283 = vpack.c.bf16 %v282, %v282
        %v284 = vld [vmem:[%s1] sm:$0xf]
        %v285 = vld [vmem:[%s1 + $0x4] sm:$0xf]
        %v286 = vld [vmem:[%s1 + $0x8] sm:$0xf]
        %v287 = vld [vmem:[%s1 + $0xc] sm:$0xf]
        %v288 = vld [vmem:[%s2] sm:$0x1]
        %v290 = vlaneseq
        %v291 = vshrl.u32 %v290, 7
        %v292 = vsub.s32 0, %v291
        %v293 = vrot.slane %v288, %v292
        %v299 = vunpack.c.l.b16 %v284
        %v300 = vunpack.c.l.b16 %v285
        %v301 = vunpack.c.l.b16 %v286
        %v302 = vunpack.c.l.b16 %v287
        %v303 = vpack.c.b16 %v300, %v299
        %v304 = vpack.c.b16 %v302, %v301
        %vm307 = vcmask 261120
        %v309 = vsel %vm307, %v283, 0
        %311 = vmatprep.subr.bf16.mxu0 0
        %312 = vmatpush1.bf16.msra.mxu0 %v303
        %313 = vmatprep.subr.bf16.mxu0 0
        %314 = vmatpush1.bf16.msra.mxu0 %v304
        %315 = vmatprep.subr.bf16.mxu0 0
        %316 = vmatpush1.bf16.msra.mxu0 0
        %317 = vmatprep.subr.bf16.mxu0 0
        %318 = vmatpush1.bf16.msra.mxu0 0
        %319 = vmatprep.subr.bf16.mxu0 0
        %320 = vmatpush1.bf16.msra.mxu0 0
        %321 = vmatprep.subr.bf16.mxu0 0
        %322 = vmatpush1.bf16.msra.mxu0 0
        %323 = vmatprep.subr.bf16.mxu0 0
        %324 = vmatpush1.bf16.msra.mxu0 0
        %325 = vmatprep.subr.bf16.mxu0 0
        %326 = vmatpush1.bf16.msra.mxu0 0
        %327 = vmatprep.subr.bf16.mxu0 0
        %328 = vmatpush1.bf16.msra.mxu0 0
        %329 = vmatprep.subr.bf16.mxu0 0
        %330 = vmatpush1.bf16.msra.mxu0 0
        %331 = vmatprep.subr.bf16.mxu0 0
        %332 = vmatpush1.bf16.msra.mxu0 0
        %333 = vmatprep.subr.bf16.mxu0 0
        %334 = vmatpush1.bf16.msra.mxu0 0
        %335 = vmatprep.subr.bf16.mxu0 0
        %336 = vmatpush1.bf16.msra.mxu0 0
        %337 = vmatprep.subr.bf16.mxu0 0
        %338 = vmatpush1.bf16.msra.mxu0 0
        %339 = vmatprep.subr.bf16.mxu0 0
        %340 = vmatpush1.bf16.msra.mxu0 0
        %341 = vmatprep.subr.bf16.mxu0 0
        %342 = vmatpush1.bf16.msra.mxu0 0
        %343 = vmatprep.mubr.bf16.mxu0 0
        %344 = vmatmul.mubr.bf16.gmra.mrb[0].mxu0 %v309
        %v345 = vpop.f32.mrb[0].mxu0
        %v346 = vadd.f32 %v293, %v345
        %v347 = vpop.f32.mrb[0].mxu0
        %v348 = vpop.f32.mrb[0].mxu0
        %v349 = vpop.f32.mrb[0].mxu0
        %350 = vdwg.mxu0
        %vm351 = vcmask 523264
        %352 = vst.msk [vmem:[%s256] sm:$0xff] %vm351, %v346
        %v353 = vld [vmem:[%s274] sm:$0xff]
        %v354 = vsel %vm351, %v346, -inf
        %355 = vmax.xlane.f32.xlu0 %v354
        %v356 = vpop.xlane.xlu0 %355
        %v357 = vsub.f32 %v346, %v356
        %v358 = vmul.f32 %v357, 1.442695
        %v359 = vpow.pop %v358
        %v360 = vsel %vm351, %v359, 0.0
        %361 = vadd.xlane.f32.xlu0 %v360
        %v362 = vpop.xlane.xlu0 %361
        %v363 = vlog2.pop %v362
        %v364 = vmul.f32 %v363, 0.6931472
        %v365 = vadd.f32 %v364, %v356
        %v366 = vlaneseq
        %v367 = vand.u32 %v366, 127
        %368 = vset.pattern.permute.xlu0 0
        %369 = vperm.xlu0 %368, %v353
        %v370 = vpop.permute.xlu0 %369
        %vm371 = vcmp.eq.s32.totalorder %v367, %v370
        %v372 = vsel %vm371, %v346, 0.0
        %v373 = vsel %vm351, %v372, 0.0
        %374 = vadd.xlane.f32.xlu0 %v373
        %v375 = vpop.xlane.xlu0 %374
        %vm376 = vcmp.ne.s32.totalorder %v353, 4294967196
        %v377 = vsel %vm376, 1, 0
        %v378 = vcvt.s32.f32 %v377
        %v379 = vsub.f32 %v365, %v375
        %v380 = vmul.f32 %v379, %v378
        %vm381 = vcmask 7168
        %v382 = vsel %vm381, %v380, 0.0
        %v383 = vrot.slane %v382, 4
        %v384 = vadd.f32 %v382, %v383
        %v385 = vrot.slane %v384, 2
        %v386 = vadd.f32 %v384, %v385
        %v387 = vrot.slane %v386, 1
        %v388 = vadd.f32 %v386, %v387
        %vm389 = vcmask 0
        %390 = vst.msk [vmem:[%s277] sm:$0x1] %vm389, %v388
        %v391 = vsel %vm381, %v378, 0.0
        %v392 = vrot.slane %v391, 4
        %v393 = vadd.f32 %v391, %v392
        %v394 = vrot.slane %v393, 2
        %v395 = vadd.f32 %v393, %v394
        %v396 = vrot.slane %v395, 1
        %v397 = vadd.f32 %v395, %v396
        %398 = vst.msk [vmem:[%s280] sm:$0x1] %vm389, %v397
        %s399 = sand.u32 %s123, 1
        %s400 = scalar_lea.sflag [#allocation3], %s399
        %s401 = sand.u32 %s123, 1
        %s402 = smul.addr %s401, 8
        %s403 = scalar_lea.vmem [#allocation2], %s402
        %p404 = scmp.lt.s32.totalorder %s21, 1
        %s405 = scalar_select %p404, %s21, 1
        %s406 = scalar_lea.vmem %s5, %s405
        %p407 = scmp.lt.s32.totalorder %s21, 1
        %s408 = scalar_select %p407, %s21, 1
        %s409 = scalar_lea.vmem %s6, %s408
        // Predicated region
        $region37: #{medical_phobert_forward.11} parent=35 // pred_check
          %p410 = pneg %p133
        $region38: #{medical_phobert_forward.11} parent=35 // pred_check_branch
          %412 = sbr.rel (%p410) target = $region40
        $region39: #{medical_phobert_forward.11} parent=35 // pred_region
          %s414 = ssub.s32 128, 128
          %415 = vsyncadd %s400, %s414
          %s416 = smul.addr %s21, 128
          %s417 = scalar_lea.hbm %s4, %s416
          %s419 = sshll.u32 %s403, 4
          %s420 = int_to_ptr.vmem [resolvable:$true] %s419
          %422 = dma.vmem_to_hbm [thread:$0]  %s420, 128, %s417, %s400
        $region40: #{medical_phobert_forward.11} parent=35 // pred_fallthru
          _
        // Predicated region
        $region41: #{medical_phobert_forward.11} parent=35 // pred_check
          %p423 = pneg %p159
        $region42: #{medical_phobert_forward.11} parent=35 // pred_check_branch
          %425 = sbr.rel (%p423) target = $region44
        $region43: #{medical_phobert_forward.11} parent=35 // pred_region
          _
        $region44: #{medical_phobert_forward.11} parent=35 // pred_fallthru
          _
        // Predicated region
        $region45: #{medical_phobert_forward.11} parent=35 // pred_check
          %p426 = pneg %p185
        $region46: #{medical_phobert_forward.11} parent=35 // pred_check_branch
          %428 = sbr.rel (%p426) target = $region48
        $region47: #{medical_phobert_forward.11} parent=35 // pred_region
          _
        $region48: #{medical_phobert_forward.11} parent=35 // pred_fallthru
          _
      $region36: #{medical_phobert_forward.11} parent=5 // pred_fallthru
        _
      %p429 = scmp.le.s32.totalorder 2, %s16
      // Predicated region
      $region49: #{medical_phobert_forward.11} parent=5 // pred_check
        %p430 = pneg %p429
      $region50: #{medical_phobert_forward.11} parent=5 // pred_check_branch
        %432 = sbr.rel (%p430) target = $region52
      $region51: #{medical_phobert_forward.11} parent=5 // pred_region
        %s433 = ssub.s32 %s16, 2
        // Predicated region
        $region53: #{medical_phobert_forward.11} parent=51 // pred_check
          %p434 = pneg %p139
        $region54: #{medical_phobert_forward.11} parent=51 // pred_check_branch
          %436 = sbr.rel (%p434) target = $region56
        $region55: #{medical_phobert_forward.11} parent=51 // pred_region
          %s437 = sand.u32 %s124, 1
          %s438 = scalar_lea.sflag [#allocation3], %s437
          %s439 = sand.u32 %s124, 1
          %s440 = smul.addr %s439, 8
          %s441 = scalar_lea.vmem [#allocation2], %s440
          %442 = dma.done %s438, 128
        $region56: #{medical_phobert_forward.11} parent=51 // pred_fallthru
          _
        // Predicated region
        $region57: #{medical_phobert_forward.11} parent=51 // pred_check
          %p443 = pneg %p165
        $region58: #{medical_phobert_forward.11} parent=51 // pred_check_branch
          %445 = sbr.rel (%p443) target = $region60
        $region59: #{medical_phobert_forward.11} parent=51 // pred_region
          %p446 = scmp.lt.s32.totalorder %s22, 1
          %s447 = scalar_select %p446, %s22, 1
          %s448 = scalar_lea.vmem %s5, %s447
        $region60: #{medical_phobert_forward.11} parent=51 // pred_fallthru
          _
        // Predicated region
        $region61: #{medical_phobert_forward.11} parent=51 // pred_check
          %p449 = pneg %p191
        $region62: #{medical_phobert_forward.11} parent=51 // pred_check_branch
          %451 = sbr.rel (%p449) target = $region64
        $region63: #{medical_phobert_forward.11} parent=51 // pred_region
          %p452 = scmp.lt.s32.totalorder %s22, 1
          %s453 = scalar_select %p452, %s22, 1
          %s454 = scalar_lea.vmem %s6, %s453
        $region64: #{medical_phobert_forward.11} parent=51 // pred_fallthru
          _
      $region52: #{medical_phobert_forward.11} parent=5 // pred_fallthru
        _
    $region6: #{medical_phobert_forward.11} parent=1 // loop_footer
      %s20 = sadd.s32 1, %s16
    $region7: #{medical_phobert_forward.11} parent=1 // loop_footer_branch
      %15 = sbr.rel target = $region3
    $region8: #{medical_phobert_forward.11} parent=1 // loop_exit
      _
    %455 = vsyncpa [#allocation3], 1
    %s456 = scalar_lea.sflag [#allocation3], 1
    %457 = vsyncpa %s456, 1

// kernel: medical_phobert_forward.7
$region0: #{medical_phobert_forward.7}
  #allocation0 [shape = 'u32[]', space=smem, size = 0x4, offset = 0x4, fixed_abs, tag = 'smem constant byte address 0x4 - core index']
  #allocation1 [shape = 'u32[144,128]{1,0:T(1,128)}', space=vmem, size = 0x12000, scoped, tag = 'internal scratch']
  %s0 = inlined_call_operand.vmem [shape: f32[2,8,32], index: 0, kind: input, shape index: {}]
  %s1 = inlined_call_operand.vmem [shape: bf16[32,96], index: 1, kind: input, shape index: {}]
  %s2 = inlined_call_operand.vmem [shape: f32[1,96], index: 2, kind: input, shape index: {}]
  %s3 = inlined_call_operand.vmem [shape: bf16[32,32], index: 3, kind: input, shape index: {}]
  %s4 = inlined_call_operand.vmem [shape: f32[1,32], index: 4, kind: input, shape index: {}]
  %s5 = inlined_call_operand.vmem [shape: f32[1,32], index: 5, kind: input, shape index: {}]
  %s6 = inlined_call_operand.vmem [shape: f32[1,32], index: 6, kind: input, shape index: {}]
  %s7 = inlined_call_operand.vmem [shape: f32[2,1,8], index: 7, kind: input, shape index: {}]
  %s8 = inlined_call_operand.vmem [shape: f32[2,8,32], index: 8, kind: output, shape index: {}]
  %s9 = sld [smem:[#allocation0]]
  $region65: #{medical_phobert_forward.7} parent=0
    _
  %s11 = ssub.s32 1, %s9
  %s12 = scalar_select 0, %s11, %s9
  loop: start=0, step=1, limit=4
  $region2: #{medical_phobert_forward.7} parent=0 // loop_pre_header
    _
  $region3: #{medical_phobert_forward.7} parent=0 // loop_header
    %s14 = sphi 0, %s18
    %p15 = scmp.ge.s32.totalorder %s14, 4
    %s24 = sphi 0, %s26
    %s27 = sphi 0, %s24
    %s28 = sphi 0, %s27
    %s44 = sphi 0, %s28
    %s48 = sphi 0, %s48
    %s50 = sphi 0, %s48
    %s51 = sphi 0, %s50
    %s65 = sphi 0, %s51
    %s69 = sphi 0, %s69
    %s71 = sphi 0, %s69
    %s72 = sphi 0, %s71
    %s86 = sphi 0, %s72
    %s90 = sphi 0, %s90
    %s92 = sphi 0, %s90
    %s93 = sphi 0, %s92
    %s107 = sphi 0, %s93
    %s111 = sphi 0, %s111
    %s113 = sphi 0, %s111
    %s114 = sphi 0, %s113
    %s128 = sphi 0, %s114
    %s132 = sphi 0, %s132
    %s134 = sphi 0, %s132
    %s135 = sphi 0, %s134
    %s149 = sphi 0, %s135
    %s153 = sphi 0, %s153
    %s155 = sphi 0, %s153
    %s156 = sphi 0, %s155
    %s170 = sphi 0, %s156
    %s176 = sphi 0, %s178
    %s179 = sphi 0, %s176
    %s180 = sphi 0, %s179
    %s196 = sphi 0, %s180
    %s202 = sphi 0, %s204
    %s205 = sphi 0, %s202
    %s206 = sphi 0, %s205
    %s222 = sphi 0, %s206
  $region4: #{medical_phobert_forward.7} parent=0 // loop_header_branch
    %17 = sbr.rel (%p15) target = $region8
  $region5: #{medical_phobert_forward.7} parent=0 // loop_body
    %s19 = ssub.s32 %s14, 1
    %s20 = ssub.s32 %s14, 2
    %s21 = sadd.s32 %s14, 1
    %s22 = ssub.s32 %s14, %s21
    %p23 = scmp.eq.s32.totalorder %s22, 0
    %s25 = sadd.s32 %s24, 1
    %s26 = scalar_select %p23, %s24, %s25
    %p29 = pneg %p23
    %p30 = scmp.eq.s32.totalorder %s14, 1
    %p31 = por %p29, %p30
    %p32 = scmp.ne.s32.totalorder %s24, %s27
    %p33 = scmp.eq.s32.totalorder %s14, 0
    %p34 = por %p32, %p33
    %p35 = scmp.ne.s32.totalorder %s24, %s27
    %p36 = scmp.eq.s32.totalorder %s19, 1
    %p37 = por %p35, %p36
    %p38 = scmp.ne.s32.totalorder %s27, %s28
    %p39 = scmp.eq.s32.totalorder %s19, 0
    %p40 = por %p38, %p39
    %p41 = scmp.ne.s32.totalorder %s27, %s28
    %p42 = scmp.eq.s32.totalorder %s20, 1
    %p43 = por %p41, %p42
    %p45 = scmp.ne.s32.totalorder %s28, %s44
    %p46 = scmp.eq.s32.totalorder %s20, 0
    %p47 = por %p45, %p46
    %s49 = sadd.s32 %s48, 1
    %p52 = scmp.eq.s32.totalorder %s14, 1
    %p53 = scmp.ne.s32.totalorder %s48, %s50
    %p54 = scmp.eq.s32.totalorder %s14, 0
    %p55 = por %p53, %p54
    %p56 = scmp.ne.s32.totalorder %s48, %s50
    %p57 = scmp.eq.s32.totalorder %s19, 1
    %p58 = por %p56, %p57
    %p59 = scmp.ne.s32.totalorder %s50, %s51
    %p60 = scmp.eq.s32.totalorder %s19, 0
    %p61 = por %p59, %p60
    %p62 = scmp.ne.s32.totalorder %s50, %s51
    %p63 = scmp.eq.s32.totalorder %s20, 1
    %p64 = por %p62, %p63
    %p66 = scmp.ne.s32.totalorder %s51, %s65
    %p67 = scmp.eq.s32.totalorder %s20, 0
    %p68 = por %p66, %p67
    %s70 = sadd.s32 %s69, 1
    %p73 = scmp.eq.s32.totalorder %s14, 1
    %p74 = scmp.ne.s32.totalorder %s69, %s71
    %p75 = scmp.eq.s32.totalorder %s14, 0
    %p76 = por %p74, %p75
    %p77 = scmp.ne.s32.totalorder %s69, %s71
    %p78 = scmp.eq.s32.totalorder %s19, 1
    %p79 = por %p77, %p78
    %p80 = scmp.ne.s32.totalorder %s71, %s72
    %p81 = scmp.eq.s32.totalorder %s19, 0
    %p82 = por %p80, %p81
    %p83 = scmp.ne.s32.totalorder %s71, %s72
    %p84 = scmp.eq.s32.totalorder %s20, 1
    %p85 = por %p83, %p84
    %p87 = scmp.ne.s32.totalorder %s72, %s86
    %p88 = scmp.eq.s32.totalorder %s20, 0
    %p89 = por %p87, %p88
    %s91 = sadd.s32 %s90, 1
    %p94 = scmp.eq.s32.totalorder %s14, 1
    %p95 = scmp.ne.s32.totalorder %s90, %s92
    %p96 = scmp.eq.s32.totalorder %s14, 0
    %p97 = por %p95, %p96
    %p98 = scmp.ne.s32.totalorder %s90, %s92
    %p99 = scmp.eq.s32.totalorder %s19, 1
    %p100 = por %p98, %p99
    %p101 = scmp.ne.s32.totalorder %s92, %s93
    %p102 = scmp.eq.s32.totalorder %s19, 0
    %p103 = por %p101, %p102
    %p104 = scmp.ne.s32.totalorder %s92, %s93
    %p105 = scmp.eq.s32.totalorder %s20, 1
    %p106 = por %p104, %p105
    %p108 = scmp.ne.s32.totalorder %s93, %s107
    %p109 = scmp.eq.s32.totalorder %s20, 0
    %p110 = por %p108, %p109
    %s112 = sadd.s32 %s111, 1
    %p115 = scmp.eq.s32.totalorder %s14, 1
    %p116 = scmp.ne.s32.totalorder %s111, %s113
    %p117 = scmp.eq.s32.totalorder %s14, 0
    %p118 = por %p116, %p117
    %p119 = scmp.ne.s32.totalorder %s111, %s113
    %p120 = scmp.eq.s32.totalorder %s19, 1
    %p121 = por %p119, %p120
    %p122 = scmp.ne.s32.totalorder %s113, %s114
    %p123 = scmp.eq.s32.totalorder %s19, 0
    %p124 = por %p122, %p123
    %p125 = scmp.ne.s32.totalorder %s113, %s114
    %p126 = scmp.eq.s32.totalorder %s20, 1
    %p127 = por %p125, %p126
    %p129 = scmp.ne.s32.totalorder %s114, %s128
    %p130 = scmp.eq.s32.totalorder %s20, 0
    %p131 = por %p129, %p130
    %s133 = sadd.s32 %s132, 1
    %p136 = scmp.eq.s32.totalorder %s14, 1
    %p137 = scmp.ne.s32.totalorder %s132, %s134
    %p138 = scmp.eq.s32.totalorder %s14, 0
    %p139 = por %p137, %p138
    %p140 = scmp.ne.s32.totalorder %s132, %s134
    %p141 = scmp.eq.s32.totalorder %s19, 1
    %p142 = por %p140, %p141
    %p143 = scmp.ne.s32.totalorder %s134, %s135
    %p144 = scmp.eq.s32.totalorder %s19, 0
    %p145 = por %p143, %p144
    %p146 = scmp.ne.s32.totalorder %s134, %s135
    %p147 = scmp.eq.s32.totalorder %s20, 1
    %p148 = por %p146, %p147
    %p150 = scmp.ne.s32.totalorder %s135, %s149
    %p151 = scmp.eq.s32.totalorder %s20, 0
    %p152 = por %p150, %p151
    %s154 = sadd.s32 %s153, 1
    %p157 = scmp.eq.s32.totalorder %s14, 1
    %p158 = scmp.ne.s32.totalorder %s153, %s155
    %p159 = scmp.eq.s32.totalorder %s14, 0
    %p160 = por %p158, %p159
    %p161 = scmp.ne.s32.totalorder %s153, %s155
    %p162 = scmp.eq.s32.totalorder %s19, 1
    %p163 = por %p161, %p162
    %p164 = scmp.ne.s32.totalorder %s155, %s156
    %p165 = scmp.eq.s32.totalorder %s19, 0
    %p166 = por %p164, %p165
    %p167 = scmp.ne.s32.totalorder %s155, %s156
    %p168 = scmp.eq.s32.totalorder %s20, 1
    %p169 = por %p167, %p168
    %p171 = scmp.ne.s32.totalorder %s156, %s170
    %p172 = scmp.eq.s32.totalorder %s20, 0
    %p173 = por %p171, %p172
    %s174 = ssub.s32 %s14, %s21
    %p175 = scmp.eq.s32.totalorder %s174, 0
    %s177 = sadd.s32 %s176, 1
    %s178 = scalar_select %p175, %s176, %s177
    %p181 = pneg %p175
    %p182 = scmp.eq.s32.totalorder %s14, 1
    %p183 = por %p181, %p182
    %p184 = scmp.ne.s32.totalorder %s176, %s179
    %p185 = scmp.eq.s32.totalorder %s14, 0
    %p186 = por %p184, %p185
    %p187 = scmp.ne.s32.totalorder %s176, %s179
    %p188 = scmp.eq.s32.totalorder %s19, 1
    %p189 = por %p187, %p188
    %p190 = scmp.ne.s32.totalorder %s179, %s180
    %p191 = scmp.eq.s32.totalorder %s19, 0
    %p192 = por %p190, %p191
    %p193 = scmp.ne.s32.totalorder %s179, %s180
    %p194 = scmp.eq.s32.totalorder %s20, 1
    %p195 = por %p193, %p194
    %p197 = scmp.ne.s32.totalorder %s180, %s196
    %p198 = scmp.eq.s32.totalorder %s20, 0
    %p199 = por %p197, %p198
    %s200 = ssub.s32 %s14, %s21
    %p201 = scmp.eq.s32.totalorder %s200, 0
    %s203 = sadd.s32 %s202, 1
    %s204 = scalar_select %p201, %s202, %s203
    %p207 = pneg %p201
    %p208 = scmp.eq.s32.totalorder %s14, 1
    %p209 = por %p207, %p208
    %p210 = scmp.ne.s32.totalorder %s202, %s205
    %p211 = scmp.eq.s32.totalorder %s14, 0
    %p212 = por %p210, %p211
    %p213 = scmp.ne.s32.totalorder %s202, %s205
    %p214 = scmp.eq.s32.totalorder %s19, 1
    %p215 = por %p213, %p214
    %p216 = scmp.ne.s32.totalorder %s205, %s206
    %p217 = scmp.eq.s32.totalorder %s19, 0
    %p218 = por %p216, %p217
    %p219 = scmp.ne.s32.totalorder %s205, %s206
    %p220 = scmp.eq.s32.totalorder %s20, 1
    %p221 = por %p219, %p220
    %p223 = scmp.ne.s32.totalorder %s206, %s222
    %p224 = scmp.eq.s32.totalorder %s20, 0
    %p225 = por %p223, %p224
    %p226 = scmp.le.s32.totalorder 1, %s14
    %p227 = scmp.lt.s32.totalorder %s14, 3
    %p228 = pnand %p226, %p227
    %p229 = pneg %p228
    // Predicated region
    $region9: #{medical_phobert_forward.7} parent=5 // pred_check
      _
    $region10: #{medical_phobert_forward.7} parent=5 // pred_check_branch
      %231 = sbr.rel (%p228) target = $region12
    $region11: #{medical_phobert_forward.7} parent=5 // pred_region
      %s232 = ssub.s32 %s14, 1
      // Predicated region
      $region13: #{medical_phobert_forward.7} parent=11 // pred_check
        %p233 = pneg %p61
      $region14: #{medical_phobert_forward.7} parent=11 // pred_check_branch
        %235 = sbr.rel (%p233) target = $region16
      $region15: #{medical_phobert_forward.7} parent=11 // pred_region
        _
      $region16: #{medical_phobert_forward.7} parent=11 // pred_fallthru
        _
      // Predicated region
      $region17: #{medical_phobert_forward.7} parent=11 // pred_check
        %p236 = pneg %p82
      $region18: #{medical_phobert_forward.7} parent=11 // pred_check_branch
        %238 = sbr.rel (%p236) target = $region20
      $region19: #{medical_phobert_forward.7} parent=11 // pred_region
        _
      $region20: #{medical_phobert_forward.7} parent=11 // pred_fallthru
        _
      // Predicated region
      $region21: #{medical_phobert_forward.7} parent=11 // pred_check
        %p239 = pneg %p103
      $region22: #{medical_phobert_forward.7} parent=11 // pred_check_branch
        %241 = sbr.rel (%p239) target = $region24
      $region23: #{medical_phobert_forward.7} parent=11 // pred_region
        _
      $region24: #{medical_phobert_forward.7} parent=11 // pred_fallthru
        _
      // Predicated region
      $region25: #{medical_phobert_forward.7} parent=11 // pred_check
        %p242 = pneg %p124
      $region26: #{medical_phobert_forward.7} parent=11 // pred_check_branch
        %244 = sbr.rel (%p242) target = $region28
      $region27: #{medical_phobert_forward.7} parent=11 // pred_region
        _
      $region28: #{medical_phobert_forward.7} parent=11 // pred_fallthru
        _
      // Predicated region
      $region29: #{medical_phobert_forward.7} parent=11 // pred_check
        %p245 = pneg %p145
      $region30: #{medical_phobert_forward.7} parent=11 // pred_check_branch
        %247 = sbr.rel (%p245) target = $region32
      $region31: #{medical_phobert_forward.7} parent=11 // pred_region
        _
      $region32: #{medical_phobert_forward.7} parent=11 // pred_fallthru
        _
      // Predicated region
      $region33: #{medical_phobert_forward.7} parent=11 // pred_check
        %p248 = pneg %p166
      $region34: #{medical_phobert_forward.7} parent=11 // pred_check_branch
        %250 = sbr.rel (%p248) target = $region36
      $region35: #{medical_phobert_forward.7} parent=11 // pred_region
        _
      $region36: #{medical_phobert_forward.7} parent=11 // pred_fallthru
        _
    $region12: #{medical_phobert_forward.7} parent=5 // pred_fallthru
      _
    %p251 = scmp.lt.s32.totalorder %s14, 2
    // Predicated region
    $region37: #{medical_phobert_forward.7} parent=5 // pred_check
      %p252 = pneg %p251
    $region38: #{medical_phobert_forward.7} parent=5 // pred_check_branch
      %254 = sbr.rel (%p252) target = $region40
    $region39: #{medical_phobert_forward.7} parent=5 // pred_region
      // Predicated region
      $region41: #{medical_phobert_forward.7} parent=39 // pred_check
        %p255 = pneg %p34
      $region42: #{medical_phobert_forward.7} parent=39 // pred_check_branch
        %257 = sbr.rel (%p255) target = $region44
      $region43: #{medical_phobert_forward.7} parent=39 // pred_region
        %p258 = scmp.lt.s32.totalorder %s14, 1
        %s259 = scalar_select %p258, %s14, 1
        %s260 = smul.addr %s259, 8
        %s261 = scalar_lea.vmem %s0, %s260
      $region44: #{medical_phobert_forward.7} parent=39 // pred_fallthru
        _
      // Predicated region
      $region45: #{medical_phobert_forward.7} parent=39 // pred_check
        %p262 = pneg %p186
      $region46: #{medical_phobert_forward.7} parent=39 // pred_check_branch
        %264 = sbr.rel (%p262) target = $region48
      $region47: #{medical_phobert_forward.7} parent=39 // pred_region
        %p265 = scmp.lt.s32.totalorder %s14, 1
        %s266 = scalar_select %p265, %s14, 1
        %s267 = scalar_lea.vmem %s7, %s266
      $region48: #{medical_phobert_forward.7} parent=39 // pred_fallthru
        _
    $region40: #{medical_phobert_forward.7} parent=5 // pred_fallthru
      _
    %p268 = scmp.le.s32.totalorder 1, %s14
    %p269 = scmp.lt.s32.totalorder %s14, 3
    %p270 = pnand %p268, %p269
    %p271 = pneg %p270
    // Predicated region
    $region49: #{medical_phobert_forward.7} parent=5 // pred_check
      _
    $region50: #{medical_phobert_forward.7} parent=5 // pred_check_branch
      %273 = sbr.rel (%p270) target = $region52
    $region51: #{medical_phobert_forward.7} parent=5 // pred_region
      %s274 = ssub.s32 %s14, 1
      %p275 = scmp.lt.s32.totalorder %s19, 1
      %s276 = scalar_select %p275, %s19, 1
      %s277 = smul.addr %s276, 8
      %s278 = scalar_lea.vmem %s0, %s277
      %p279 = pneg %p40
      %p280 = pneg %p37
      %p281 = pneg %p61
      %p282 = pneg %p58
      %p283 = pneg %p82
      %p284 = pneg %p79
      %p285 = pneg %p103
      %p286 = pneg %p100
      %p287 = pneg %p124
      %p288 = pneg %p121
      %p289 = pneg %p145
      %p290 = pneg %p142
      %p291 = pneg %p166
      %p292 = pneg %p163
      %p293 = scmp.lt.s32.totalorder %s19, 1
      %s294 = scalar_select %p293, %s19, 1
      %s295 = scalar_lea.vmem %s7, %s294
      %p296 = pneg %p192
      %p297 = pneg %p189
      %p298 = pneg %p218
      %p299 = pneg %p215
      %p300 = scmp.lt.s32.totalorder %s19, 1
      %s301 = scalar_select %p300, %s19, 1
      %s302 = smul.addr %s301, 8
      %s303 = scalar_lea.vmem %s8, %s302
      %p304 = scmp.lt.s32.totalorder %s19, 1
      %s305 = scalar_select %p304, %s19, 1
      %s306 = smul.addr %s305, 8
      %s307 = scalar_lea.vmem %s0, %s306
      %p308 = scmp.lt.s32.totalorder %s19, 1
      %s309 = scalar_select %p308, %s19, 1
      %s310 = scalar_lea.vmem %s7, %s309
      %p311 = scmp.lt.s32.totalorder %s19, 1
      %s312 = scalar_select %p311, %s19, 1
      %s313 = smul.addr %s312, 8
      %s314 = scalar_lea.vmem %s8, %s313
      %v316 = vld [vmem:[%s307] sm:$0xff]
      %v317 = vpack.c.bf16 %v316, %v316
      %v318 = vld [vmem:[%s1] sm:$0xf]
      %v319 = vld [vmem:[%s1 + $0x4] sm:$0xf]
      %v320 = vld [vmem:[%s1 + $0x8] sm:$0xf]
      %v321 = vld [vmem:[%s1 + $0xc] sm:$0xf]
      %v322 = vld [vmem:[%s2] sm:$0x1]
      %v324 = vlaneseq
      %v325 = vshrl.u32 %v324, 7
      %v326 = vsub.s32 0, %v325
      %v327 = vrot.slane %v322, %v326
      %v333 = vunpack.c.l.b16 %v318
      %v334 = vunpack.c.l.b16 %v319
      %v335 = vunpack.c.l.b16 %v320
      %v336 = vunpack.c.l.b16 %v321
      %v337 = vpack.c.b16 %v334, %v333
      %v338 = vpack.c.b16 %v336, %v335
      %vm341 = vcmask 261120
      %v343 = vsel %vm341, %v317, 0
      %345 = vmatprep.subr.bf16.mxu0 0
      %346 = vmatpush1.bf16.msra.mxu0 %v337
      %347 = vmatprep.subr.bf16.mxu0 0
      %348 = vmatpush1.bf16.msra.mxu0 %v338
      %349 = vmatprep.subr.bf16.mxu0 0
      %350 = vmatpush1.bf16.msra.mxu0 0
      %351 = vmatprep.subr.bf16.mxu0 0
      %352 = vmatpush1.bf16.msra.mxu0 0
      %353 = vmatprep.subr.bf16.mxu0 0
      %354 = vmatpush1.bf16.msra.mxu0 0
      %355 = vmatprep.subr.bf16.mxu0 0
      %356 = vmatpush1.bf16.msra.mxu0 0
      %357 = vmatprep.subr.bf16.mxu0 0
      %358 = vmatpush1.bf16.msra.mxu0 0
      %359 = vmatprep.subr.bf16.mxu0 0
      %360 = vmatpush1.bf16.msra.mxu0 0
      %361 = vmatprep.subr.bf16.mxu0 0
      %362 = vmatpush1.bf16.msra.mxu0 0
      %363 = vmatprep.subr.bf16.mxu0 0
      %364 = vmatpush1.bf16.msra.mxu0 0
      %365 = vmatprep.subr.bf16.mxu0 0
      %366 = vmatpush1.bf16.msra.mxu0 0
      %367 = vmatprep.subr.bf16.mxu0 0
      %368 = vmatpush1.bf16.msra.mxu0 0
      %369 = vmatprep.subr.bf16.mxu0 0
      %370 = vmatpush1.bf16.msra.mxu0 0
      %371 = vmatprep.subr.bf16.mxu0 0
      %372 = vmatpush1.bf16.msra.mxu0 0
      %373 = vmatprep.subr.bf16.mxu0 0
      %374 = vmatpush1.bf16.msra.mxu0 0
      %375 = vmatprep.subr.bf16.mxu0 0
      %376 = vmatpush1.bf16.msra.mxu0 0
      %377 = vmatprep.mubr.bf16.mxu0 0
      %378 = vmatmul.mubr.bf16.gmra.mrb[0].mxu0 %v343
      %v379 = vpop.f32.mrb[0].mxu0
      %v380 = vadd.f32 %v327, %v379
      %v381 = vpop.f32.mrb[0].mxu0
      %v382 = vpop.f32.mrb[0].mxu0
      %v383 = vpop.f32.mrb[0].mxu0
      %384 = vdwg.mxu0
      %v385 = vld [vmem:[%s310] sm:$0x1]
      %v386 = vpack.c.bf16 %v380, %v380
      %388 = vrot.lane.b32.xlu0 %v386, 96
      %v389 = vpop.permute.xlu0 %388
      %vm390 = vcmask 130048
      %v392 = vsel %vm390, %v386, 0
      %v395 = vsel %vm390, %v389, 0
      %397 = vmatprep.subr.bf16.mxu0 0
      %398 = vmatpush1.bf16.xpose.msra.mxu0 %v395
      %399 = vmatprep.subr.bf16.mxu0 0
      %400 = vmatpush1.bf16.xpose.msra.mxu0 0
      %401 = vmatprep.subr.bf16.mxu0 0
      %402 = vmatpush1.bf16.xpose.msra.mxu0 0
      %403 = vmatprep.subr.bf16.mxu0 0
      %404 = vmatpush1.bf16.xpose.msra.mxu0 0
      %405 = vmatprep.subr.bf16.mxu0 0
      %406 = vmatpush1.bf16.xpose.msra.mxu0 0
      %407 = vmatprep.subr.bf16.mxu0 0
      %408 = vmatpush1.bf16.xpose.msra.mxu0 0
      %409 = vmatprep.subr.bf16.mxu0 0
      %410 = vmatpush1.bf16.xpose.msra.mxu0 0
      %411 = vmatprep.subr.bf16.mxu0 0
      %412 = vmatpush1.bf16.xpose.msra.mxu0 0
      %413 = vmatprep.subr.bf16.mxu0 0
      %414 = vmatpush1.bf16.xpose.msra.mxu0 0
      %415 = vmatprep.subr.bf16.mxu0 0
      %416 = vmatpush1.bf16.xpose.msra.mxu0 0
      %417 = vmatprep.subr.bf16.mxu0 0
      %418 = vmatpush1.bf16.xpose.msra.mxu0 0
      %419 = vmatprep.subr.bf16.mxu0 0
      %420 = vmatpush1.bf16.xpose.msra.mxu0 0
      %421 = vmatprep.subr.bf16.mxu0 0
      %422 = vmatpush1.bf16.xpose.msra.mxu0 0
      %423 = vmatprep.subr.bf16.mxu0 0
      %424 = vmatpush1.bf16.xpose.msra.mxu0 0
      %425 = vmatprep.subr.bf16.mxu0 0
      %426 = vmatpush1.bf16.xpose.msra.mxu0 0
      %427 = vmatprep.subr.bf16.mxu0 0
      %428 = vmatpush1.bf16.xpose.msra.mxu0 0
      %429 = vmatprep.mubr.bf16.mxu0 0
      %430 = vmatmul.mubr.bf16.gmra.mrb[0].mxu0 %v392
      %v431 = vpop.f32.mrb[0].mxu0
      %v432 = vadd.f32 0.0, %v431
      %v433 = vpop.f32.mrb[0].mxu0
      %v434 = vpop.f32.mrb[0].mxu0
      %v435 = vpop.f32.mrb[0].mxu0
      %436 = vdwg.mxu0
      %v437 = vmul.f32 %v432, 0.25
      %v439 = vlaneseq
      %v440 = vshrl.u32 %v439, 7
      %v441 = vsub.s32 0, %v440
      %v442 = vrot.slane %v385, %v441
      %v444 = vadd.f32 %v437, %v442
      %vm445 = vcmask 64512
      %v446 = vsel %vm445, %v444, -inf
      %447 = vmax.xlane.f32.xlu0 %v446
      %v448 = vpop.xlane.xlu0 %447
      %v449 = vsub.f32 %v444, %v448
      %v450 = vmul.f32 %v449, 1.442695
      %v451 = vpow.pop %v450
      %v452 = vsel %vm445, %v451, 0.0
      %453 = vadd.xlane.f32.xlu0 %v452
      %v454 = vpop.xlane.xlu0 %453
      %v455 = vrcp.pop %v454
      %v456 = vmul.f32 %v451, %v455
      %v457 = vpack.c.bf16 %v456, %v456
      %458 = vrot.lane.b32.xlu0 %v386, 64
      %v459 = vpop.permute.xlu0 %458
      %v461 = vsel %vm445, %v457, 0
      %vm463 = vcmask 1043456
      %v465 = vsel %vm463, %v459, 0
      %467 = vmatprep.subr.bf16.mxu0 0
      %468 = vmatpush1.bf16.msra.mxu0 %v465
      %469 = vmatprep.subr.bf16.mxu0 0
      %470 = vmatpush1.bf16.msra.mxu0 0
      %471 = vmatprep.subr.bf16.mxu0 0
      %472 = vmatpush1.bf16.msra.mxu0 0
      %473 = vmatprep.subr.bf16.mxu0 0
      %474 = vmatpush1.bf16.msra.mxu0 0
      %475 = vmatprep.subr.bf16.mxu0 0
      %476 = vmatpush1.bf16.msra.mxu0 0
      %477 = vmatprep.subr.bf16.mxu0 0
      %478 = vmatpush1.bf16.msra.mxu0 0
      %479 = vmatprep.subr.bf16.mxu0 0
      %480 = vmatpush1.bf16.msra.mxu0 0
      %481 = vmatprep.subr.bf16.mxu0 0
      %482 = vmatpush1.bf16.msra.mxu0 0
      %483 = vmatprep.subr.bf16.mxu0 0
      %484 = vmatpush1.bf16.msra.mxu0 0
      %485 = vmatprep.subr.bf16.mxu0 0
      %486 = vmatpush1.bf16.msra.mxu0 0
      %487 = vmatprep.subr.bf16.mxu0 0
      %488 = vmatpush1.bf16.msra.mxu0 0
      %489 = vmatprep.subr.bf16.mxu0 0
      %490 = vmatpush1.bf16.msra.mxu0 0
      %491 = vmatprep.subr.bf16.mxu0 0
      %492 = vmatpush1.bf16.msra.mxu0 0
      %493 = vmatprep.subr.bf16.mxu0 0
      %494 = vmatpush1.bf16.msra.mxu0 0
      %495 = vmatprep.subr.bf16.mxu0 0
      %496 = vmatpush1.bf16.msra.mxu0 0
      %497 = vmatprep.subr.bf16.mxu0 0
      %498 = vmatpush1.bf16.msra.mxu0 0
      %499 = vmatprep.mubr.bf16.mxu0 0
      %500 = vmatmul.mubr.bf16.gmra.mrb[0].mxu0 %v461
      %v501 = vpop.f32.mrb[0].mxu0
      %v502 = vadd.f32 0.0, %v501
      %v503 = vpop.f32.mrb[0].mxu0
      %v504 = vpop.f32.mrb[0].mxu0
      %v505 = vpop.f32.mrb[0].mxu0
      %506 = vdwg.mxu0
      %507 = vrot.lane.b32.xlu0 %v386, 112
      %v508 = vpop.permute.xlu0 %507
      %509 = vrot.lane.b32.xlu0 %v386, 80
      %v510 = vpop.permute.xlu0 %509
      %v512 = vsel %vm390, %v508, 0
      %v515 = vsel %vm390, %v510, 0
      %517 = vmatprep.subr.bf16.mxu0 0
      %518 = vmatpush1.bf16.xpose.msra.mxu0 %v515
      %519 = vmatprep.subr.bf16.mxu0 0
      %520 = vmatpush1.bf16.xpose.msra.mxu0 0
      %521 = vmatprep.subr.bf16.mxu0 0
      %522 = vmatpush1.bf16.xpose.msra.mxu0 0
      %523 = vmatprep.subr.bf16.mxu0 0
      %524 = vmatpush1.bf16.xpose.msra.mxu0 0
      %525 = vmatprep.subr.bf16.mxu0 0
      %526 = vmatpush1.bf16.xpose.msra.mxu0 0
      %527 = vmatprep.subr.bf16.mxu0 0
      %528 = vmatpush1.bf16.xpose.msra.mxu0 0
      %529 = vmatprep.subr.bf16.mxu0 0
      %530 = vmatpush1.bf16.xpose.msra.mxu0 0
      %531 = vmatprep.subr.bf16.mxu0 0
      %532 = vmatpush1.bf16.xpose.msra.mxu0 0
      %533 = vmatprep.subr.bf16.mxu0 0
      %534 = vmatpush1.bf16.xpose.msra.mxu0 0
      %535 = vmatprep.subr.bf16.mxu0 0
      %536 = vmatpush1.bf16.xpose.msra.mxu0 0
      %537 = vmatprep.subr.bf16.mxu0 0
      %538 = vmatpush1.bf16.xpose.msra.mxu0 0
      %539 = vmatprep.subr.bf16.mxu0 0
      %540 = vmatpush1.bf16.xpose.msra.mxu0 0
      %541 = vmatprep.subr.bf16.mxu0 0
      %542 = vmatpush1.bf16.xpose.msra.mxu0 0
      %543 = vmatprep.subr.bf16.mxu0 0
      %544 = vmatpush1.bf16.xpose.msra.mxu0 0
      %545 = vmatprep.subr.bf16.mxu0 0
      %546 = vmatpush1.bf16.xpose.msra.mxu0 0
      %547 = vmatprep.subr.bf16.mxu0 0
      %548 = vmatpush1.bf16.xpose.msra.mxu0 0
      %549 = vmatprep.mubr.bf16.mxu0 0
      %550 = vmatmul.mubr.bf16.gmra.mrb[0].mxu0 %v512
      %v551 = vpop.f32.mrb[0].mxu0
      %v552 = vadd.f32 0.0, %v551
      %v553 = vpop.f32.mrb[0].mxu0
      %v554 = vpop.f32.mrb[0].mxu0
      %v555 = vpop.f32.mrb[0].mxu0
      %556 = vdwg.mxu0
      %v557 = vmul.f32 %v552, 0.25
      %v558 = vadd.f32 %v557, %v442
      %v559 = vsel %vm445, %v558, -inf
      %560 = vmax.xlane.f32.xlu0 %v559
      %v561 = vpop.xlane.xlu0 %560
      %v562 = vsub.f32 %v558, %v561
      %v563 = vmul.f32 %v562, 1.442695
      %v564 = vpow.pop %v563
      %v565 = vsel %vm445, %v564, 0.0
      %566 = vadd.xlane.f32.xlu0 %v565
      %v567 = vpop.xlane.xlu0 %566
      %v568 = vrcp.pop %v567
      %v569 = vmul.f32 %v564, %v568
      %v570 = vpack.c.bf16 %v569, %v569
      %571 = vrot.lane.b32.xlu0 %v386, 48
      %v572 = vpop.permute.xlu0 %571
      %v574 = vsel %vm445, %v570, 0
      %v577 = vsel %vm463, %v572, 0
      %579 = vmatprep.subr.bf16.mxu0 0
      %580 = vmatpush1.bf16.msra.mxu0 %v577
      %581 = vmatprep.subr.bf16.mxu0 0
      %582 = vmatpush1.bf16.msra.mxu0 0
      %583 = vmatprep.subr.bf16.mxu0 0
      %584 = vmatpush1.bf16.msra.mxu0 0
      %585 = vmatprep.subr.bf16.mxu0 0
      %586 = vmatpush1.bf16.msra.mxu0 0
      %587 = vmatprep.subr.bf16.mxu0 0
      %588 = vmatpush1.bf16.msra.mxu0 0
      %589 = vmatprep.subr.bf16.mxu0 0
      %590 = vmatpush1.bf16.msra.mxu0 0
      %591 = vmatprep.subr.bf16.mxu0 0
      %592 = vmatpush1.bf16.msra.mxu0 0
      %593 = vmatprep.subr.bf16.mxu0 0
      %594 = vmatpush1.bf16.msra.mxu0 0
      %595 = vmatprep.subr.bf16.mxu0 0
      %596 = vmatpush1.bf16.msra.mxu0 0
      %597 = vmatprep.subr.bf16.mxu0 0
      %598 = vmatpush1.bf16.msra.mxu0 0
      %599 = vmatprep.subr.bf16.mxu0 0
      %600 = vmatpush1.bf16.msra.mxu0 0
      %601 = vmatprep.subr.bf16.mxu0 0
      %602 = vmatpush1.bf16.msra.mxu0 0
      %603 = vmatprep.subr.bf16.mxu0 0
      %604 = vmatpush1.bf16.msra.mxu0 0
      %605 = vmatprep.subr.bf16.mxu0 0
      %606 = vmatpush1.bf16.msra.mxu0 0
      %607 = vmatprep.subr.bf16.mxu0 0
      %608 = vmatpush1.bf16.msra.mxu0 0
      %609 = vmatprep.subr.bf16.mxu0 0
      %610 = vmatpush1.bf16.msra.mxu0 0
      %611 = vmatprep.mubr.bf16.mxu0 0
      %612 = vmatmul.mubr.bf16.gmra.mrb[0].mxu0 %v574
      %v613 = vpop.f32.mrb[0].mxu0
      %v614 = vadd.f32 0.0, %v613
      %v615 = vpop.f32.mrb[0].mxu0
      %v616 = vpop.f32.mrb[0].mxu0
      %v617 = vpop.f32.mrb[0].mxu0
      %618 = vdwg.mxu0
      %620 = vrot.lane.b32.xlu0 %v614, 16
      %v621 = vpop.permute.xlu0 %620
      %v623 = vsel %vm390, %v502, %v621
      %v624 = vpack.c.bf16 %v623, %v623
      %v625 = vld [vmem:[%s3] sm:$0xf]
      %v626 = vld [vmem:[%s3 + $0x4] sm:$0xf]
      %v627 = vld [vmem:[%s3 + $0x8] sm:$0xf]
      %v628 = vld [vmem:[%s3 + $0xc] sm:$0xf]
      %v629 = vld [vmem:[%s4] sm:$0x1]
      %v631 = vlaneseq
      %v632 = vshrl.u32 %v631, 7
      %v633 = vsub.s32 0, %v632
      %v634 = vrot.slane %v629, %v633
      %v640 = vunpack.c.l.b16 %v625
      %v641 = vunpack.c.l.b16 %v626
      %v642 = vunpack.c.l.b16 %v627
      %v643 = vunpack.c.l.b16 %v628
      %v644 = vpack.c.b16 %v641, %v640
      %v645 = vpack.c.b16 %v643, %v642
      %v649 = vsel %vm341, %v624, 0
      %651 = vmatprep.subr.bf16.mxu0 0
      %652 = vmatpush1.bf16.msra.mxu0 %v644
      %653 = vmatprep.subr.bf16.mxu0 0
      %654 = vmatpush1.bf16.msra.mxu0 %v645
      %655 = vmatprep.subr.bf16.mxu0 0
      %656 = vmatpush1.bf16.msra.mxu0 0
      %657 = vmatprep.subr.bf16.mxu0 0
      %658 = vmatpush1.bf16.msra.mxu0 0
      %659 = vmatprep.subr.bf16.mxu0 0
      %660 = vmatpush1.bf16.msra.mxu0 0
      %661 = vmatprep.subr.bf16.mxu0 0
      %662 = vmatpush1.bf16.msra.mxu0 0
      %663 = vmatprep.subr.bf16.mxu0 0
      %664 = vmatpush1.bf16.msra.mxu0 0
      %665 = vmatprep.subr.bf16.mxu0 0
      %666 = vmatpush1.bf16.msra.mxu0 0
      %667 = vmatprep.subr.bf16.mxu0 0
      %668 = vmatpush1.bf16.msra.mxu0 0
      %669 = vmatprep.subr.bf16.mxu0 0
      %670 = vmatpush1.bf16.msra.mxu0 0
      %671 = vmatprep.subr.bf16.mxu0 0
      %672 = vmatpush1.bf16.msra.mxu0 0
      %673 = vmatprep.subr.bf16.mxu0 0
      %674 = vmatpush1.bf16.msra.mxu0 0
      %675 = vmatprep.subr.bf16.mxu0 0
      %676 = vmatpush1.bf16.msra.mxu0 0
      %677 = vmatprep.subr.bf16.mxu0 0
      %678 = vmatpush1.bf16.msra.mxu0 0
      %679 = vmatprep.subr.bf16.mxu0 0
      %680 = vmatpush1.bf16.msra.mxu0 0
      %681 = vmatprep.subr.bf16.mxu0 0
      %682 = vmatpush1.bf16.msra.mxu0 0
      %683 = vmatprep.mubr.bf16.mxu0 0
      %684 = vmatmul.mubr.bf16.gmra.mrb[0].mxu0 %v649
      %v685 = vpop.f32.mrb[0].mxu0
      %v686 = vadd.f32 %v634, %v685
      %v687 = vpop.f32.mrb[0].mxu0
      %v688 = vpop.f32.mrb[0].mxu0
      %v689 = vpop.f32.mrb[0].mxu0
      %690 = vdwg.mxu0
      %v691 = vadd.f32 %v686, %v316
      %v692 = vld [vmem:[%s5] sm:$0x1]
      %v693 = vld [vmem:[%s6] sm:$0x1]
      %v694 = vsel %vm341, %v691, 0.0
      %695 = vadd.xlane.f32.xlu0 %v694
      %v696 = vpop.xlane.xlu0 %695
      %v697 = vrcp.pop 32.0
      %v698 = vmul.f32 %v696, %v697
      %v699 = vsub.f32 %v691, %v698
      %v700 = vmul.f32 %v699, %v699
      %v701 = vsel %vm341, %v700, 0.0
      %702 = vadd.xlane.f32.xlu0 %v701
      %v703 = vpop.xlane.xlu0 %702
      %v704 = vmul.f32 %v703, %v697
      %v705 = vadd.f32 %v704, 1e-05
      %v706 = vrsqrt.pop %v705
      %v707 = vmul.f32 %v699, %v706
      %v709 = vlaneseq
      %v710 = vshrl.u32 %v709, 7
      %v711 = vsub.s32 0, %v710
      %v712 = vrot.slane %v692, %v711
      %v714 = vmul.f32 %v707, %v712
      %v716 = vlaneseq
      %v717 = vshrl.u32 %v716, 7
      %v718 = vsub.s32 0, %v717
      %v719 = vrot.slane %v693, %v718
      %v721 = vadd.f32 %v714, %v719
      %722 = vst.msk [vmem:[%s314] sm:$0xff] %vm341, %v721
      %p723 = scmp.lt.s32.totalorder %s19, 1
      %s724 = scalar_select %p723, %s19, 1
      %s725 = smul.addr %s724, 8
      %s726 = scalar_lea.vmem %s8, %s725
      // Predicated region
      $region53: #{medical_phobert_forward.7} parent=51 // pred_check
        %p727 = pneg %p215
      $region54: #{medical_phobert_forward.7} parent=51 // pred_check_branch
        %729 = sbr.rel (%p727) target = $region56
      $region55: #{medical_phobert_forward.7} parent=51 // pred_region
        _
      $region56: #{medical_phobert_forward.7} parent=51 // pred_fallthru
        _
    $region52: #{medical_phobert_forward.7} parent=5 // pred_fallthru
      _
    %p730 = scmp.le.s32.totalorder 2, %s14
    // Predicated region
    $region57: #{medical_phobert_forward.7} parent=5 // pred_check
      %p731 = pneg %p730
    $region58: #{medical_phobert_forward.7} parent=5 // pred_check_branch
      %733 = sbr.rel (%p731) target = $region60
    $region59: #{medical_phobert_forward.7} parent=5 // pred_region
      %s734 = ssub.s32 %s14, 2
      // Predicated region
      $region61: #{medical_phobert_forward.7} parent=59 // pred_check
        %p735 = pneg %p221
      $region62: #{medical_phobert_forward.7} parent=59 // pred_check_branch
        %737 = sbr.rel (%p735) target = $region64
      $region63: #{medical_phobert_forward.7} parent=59 // pred_region
        %p738 = scmp.lt.s32.totalorder %s20, 1
        %s739 = scalar_select %p738, %s20, 1
        %s740 = smul.addr %s739, 8
        %s741 = scalar_lea.vmem %s8, %s740
      $region64: #{medical_phobert_forward.7} parent=59 // pred_fallthru
        _
    $region60: #{medical_phobert_forward.7} parent=5 // pred_fallthru
      _
  $region6: #{medical_phobert_forward.7} parent=0 // loop_footer
    %s18 = sadd.s32 1, %s14
  $region7: #{medical_phobert_forward.7} parent=0 // loop_footer_branch
    %13 = sbr.rel target = $region3
  $region8: #{medical_phobert_forward.7} parent=0 // loop_exit
    _

</llo_original>
